<compile_context>
chip_gen: v5e
topology: v5e:2x2
jax: 0.10.0
libtpu: 0.0.40
codegen_flags: <defaults>
</compile_context>

<pallas_src>
import functools

import jax
import jax.numpy as jnp
from jax.experimental import pallas as pl
from jax.experimental.pallas import tpu as pltpu

LN_EPS = 1e-5  # torch.nn.LayerNorm default


def _bf16(x):
    return x.astype(jnp.bfloat16)


def _layer_norm(x, w, b):
    # Single-pass statistics: mean and E[x^2], var = E[x^2] - mu^2.
    mu = jnp.mean(x, axis=-1, keepdims=True)
    ms = jnp.mean(x * x, axis=-1, keepdims=True)
    var = ms - mu * mu
    return (x - mu) * jax.lax.rsqrt(var + LN_EPS) * w + b


# ----------------------------- fused kernel ----------------------------------

def fused_forward_kernel(x_ref, w_in_ref, b_in_ref,
                         wq_ref, wk_ref, wv_ref, bq_ref, bk_ref, bv_ref,
                         wo_ref, bo_ref, n1w_ref, n1b_ref,
                         w1_ref, b1_ref, w2_ref, b2_ref, n2w_ref, n2b_ref,
                         nw_ref, nb_ref, wf_ref, bf_ref,
                         o_ref, acc_ref, *, B, t_block, d, d_in, n_layers):
    i = pl.program_id(0)
    n_blk = pl.num_programs(0)
    rows = t_block * B

    @pl.when(i == 0)
    def _():
        acc_ref[...] = jnp.zeros_like(acc_ref)

    # 1) Linear(Din, d) + ReLU on this t-block.  Rows are (t, b)-ordered so the
    #    per-t attention groups and the Flatten blocks are contiguous slices.
    x = _bf16(x_ref[...].reshape(rows, d_in))                       # (rows, Din)
    h = jnp.dot(x, w_in_ref[...], preferred_element_type=jnp.float32)
    h = jnp.maximum(h + b_in_ref[...], 0.0)                         # f32 (rows, d)

    scale = 1.0 / jnp.sqrt(jnp.float32(d))

    # 2) n_layers post-norm TransformerEncoderLayers (n_head=1), unrolled.
    #    Attention mixes over the full B axis, independently per time step t,
    #    so each t-block is self-contained (tiling over T is exact).
    for l in range(n_layers):
        hb = _bf16(h)
        q = jnp.dot(hb, wq_ref[l], preferred_element_type=jnp.float32) + bq_ref[l]
        k = jnp.dot(hb, wk_ref[l], preferred_element_type=jnp.float32) + bk_ref[l]
        v = jnp.dot(hb, wv_ref[l], preferred_element_type=jnp.float32) + bv_ref[l]
        q3 = _bf16(q.reshape(t_block, B, d))
        k3 = _bf16(k.reshape(t_block, B, d))
        v3 = _bf16(v.reshape(t_block, B, d))

        s = jnp.einsum('tbd,tcd->tbc', q3, k3,
                       preferred_element_type=jnp.float32) * scale  # (tt, B, B)
        s = s - jnp.max(s, axis=-1, keepdims=True)
        p = jnp.exp(s)
        p = p / jnp.sum(p, axis=-1, keepdims=True)                  # exact softmax
        attn = jnp.einsum('tbc,tcd->tbd', _bf16(p), v3,
                          preferred_element_type=jnp.float32).reshape(rows, d)
        attn = jnp.dot(_bf16(attn), wo_ref[l],
                       preferred_element_type=jnp.float32) + bo_ref[l]

        x1 = _layer_norm(h + attn, n1w_ref[l], n1b_ref[l])          # norm1 (f32)
        f = jnp.dot(_bf16(x1), w1_ref[l],
                    preferred_element_type=jnp.float32) + b1_ref[l]
        f = jnp.maximum(f, 0.0)
        f = jnp.dot(_bf16(f), w2_ref[l],
                    preferred_element_type=jnp.float32) + b2_ref[l]
        h = _layer_norm(x1 + f, n2w_ref[l], n2b_ref[l])             # norm2 (f32)

    # 3) final encoder LayerNorm + post-Flatten ReLU.
    h = jnp.maximum(_layer_norm(h, nw_ref[...], nb_ref[...]), 0.0)  # (rows, d)

    # 4) classifier partial sum for this t-block:
    #    logits[b, c] += sum_t sum_d h[t, b, d] * Wf[t, d, c]
    h3 = _bf16(h.reshape(t_block, B, d))
    part = jnp.einsum('tbd,tdc->tbc', h3, wf_ref[...],
                      preferred_element_type=jnp.float32)           # (tt, B, C)
    acc_ref[...] += jnp.sum(part, axis=0)

    # 5) last t-block: add bias, log_softmax, write out.
    @pl.when(i == n_blk - 1)
    def _():
        logits = acc_ref[...] + bf_ref[...]
        m = jnp.max(logits, axis=-1, keepdims=True)
        z = logits - m
        lse = jnp.log(jnp.sum(jnp.exp(z), axis=-1, keepdims=True))
        o_ref[...] = z - lse


# ----------------------------- wrapper ---------------------------------------

def _pick_t_block(T, B, *, t_block=None, target_rows=512,
                  score_bytes_cap=24 * 1024 * 1024):
    """Largest divisor of T giving >= target_rows matmul rows without letting the
    per-block attention scores (t_block*B*B*4 bytes) blow past a VMEM budget that
    is safe on v7x (64 MiB physical) as well as v5e/v6e (128 MiB)."""
    if t_block is not None:
        assert T % t_block == 0, "t_block must divide sequencelength"
        return t_block
    want = max(1, target_rows // max(B, 1))
    want = max(1, min(want, score_bytes_cap // max(B * B * 4, 1)))
    best = 1
    for c in range(1, T + 1):
        if T % c == 0 and c <= want:
            best = c
    return best


@functools.partial(jax.jit, static_argnames=("t_block",))
def transformer_forward(x, params, t_block=None):
    B, T, Din = x.shape
    d = params["w_in"].shape[1]
    L = params["wq"].shape[0]
    d_inner = params["w1"].shape[2]
    C = params["wf"].shape[2]

    tt = _pick_t_block(T, B, t_block=t_block)
    n_blk = T // tt

    # One device-side transpose to (T, B, Din): the (t, b) row ordering then falls
    # out of the t-grid BlockSpec with no in-kernel relayouts.  x is only Din=13
    # wide, so this single HBM pass is negligible vs. the encoder layers.
    x_tbd = jnp.transpose(x, (1, 0, 2))                              # (T, B, Din)

    bf16 = jnp.bfloat16
    full = lambda shape: pl.BlockSpec(shape, lambda i, s=len(shape): (0,) * s)

    kernel = functools.partial(fused_forward_kernel, B=B, t_block=tt, d=d,
                               d_in=Din, n_layers=L)

    grid_spec = pltpu.PrefetchScalarGridSpec(
        num_scalar_prefetch=0,
        grid=(n_blk,),
        in_specs=[
            pl.BlockSpec((tt, B, Din), lambda i: (i, 0, 0)),         # x t-block
            full((Din, d)), full((1, d)),                            # w_in, b_in
            full((L, d, d)), full((L, d, d)), full((L, d, d)),       # wq wk wv
            full((L, 1, d)), full((L, 1, d)), full((L, 1, d)),       # bq bk bv
            full((L, d, d)), full((L, 1, d)),                        # wo bo
            full((L, 1, d)), full((L, 1, d)),                        # n1w n1b
            full((L, d, d_inner)), full((L, 1, d_inner)),            # w1 b1
            full((L, d_inner, d)), full((L, 1, d)),                  # w2 b2
            full((L, 1, d)), full((L, 1, d)),                        # n2w n2b
            full((1, d)), full((1, d)),                              # nw nb
            pl.BlockSpec((tt, d, C), lambda i: (i, 0, 0)),           # wf t-block
            full((1, C)),                                            # bf
        ],
        out_specs=pl.BlockSpec((B, C), lambda i: (0, 0)),            # resident
        scratch_shapes=[pltpu.VMEM((B, C), jnp.float32)],            # logits acc
    )

    return pl.pallas_call(
        kernel,
        out_shape=jax.ShapeDtypeStruct((B, C), jnp.float32),
        grid_spec=grid_spec,
        compiler_params=pltpu.CompilerParams(
            dimension_semantics=("arbitrary",),      # t axis carries the logits acc
            vmem_limit_bytes=48 * 1024 * 1024,       # safe on v7x; raise ~100MiB on v5e/v6e
        ),
    )(x_tbd,
      params["w_in"].astype(bf16), params["b_in"],
      params["wq"].astype(bf16), params["wk"].astype(bf16), params["wv"].astype(bf16),
      params["bq"], params["bk"], params["bv"],
      params["wo"].astype(bf16), params["bo"],
      params["n1w"], params["n1b"],
      params["w1"].astype(bf16), params["b1"],
      params["w2"].astype(bf16), params["b2"],
      params["n2w"], params["n2b"],
      params["nw"], params["nb"],
      params["wf"].astype(bf16), params["bf"])


# ----------------------------- params ----------------------------------------

def init_params(key, input_dim, d_model, d_inner, n_layers, sequencelength,
                num_classes):
    keys = jax.random.split(key, 2 + n_layers)

    def lin(k, din, dout, scale=0.05):
        kw, kb = jax.random.split(k)
        return (jax.random.normal(kw, (din, dout), jnp.float32) * scale,
                jax.random.normal(kb, (1, dout), jnp.float32) * scale)

    w_in, b_in = lin(keys[0], input_dim, d_model)

    wq, wk, wv, bq, bk, bv = [], [], [], [], [], []
    wo, bo, w1, b1, w2, b2 = [], [], [], [], [], []
    n1w, n1b, n2w, n2b = [], [], [], []
    for i in range(n_layers):
        lk = jax.random.split(keys[1 + i], 6)
        wq_, bq_ = lin(lk[0], d_model, d_model)     # separate, lane-aligned Q/K/V
        wk_, bk_ = lin(lk[1], d_model, d_model)
        wv_, bv_ = lin(lk[2], d_model, d_model)
        wo_, bo_ = lin(lk[3], d_model, d_model)
        w1_, b1_ = lin(lk[4], d_model, d_inner)
        w2_, b2_ = lin(lk[5], d_inner, d_model)
        wq.append(wq_); bq.append(bq_); wk.append(wk_); bk.append(bk_)
        wv.append(wv_); bv.append(bv_); wo.append(wo_); bo.append(bo_)
        w1.append(w1_); b1.append(b1_); w2.append(w2_); b2.append(b2_)
        n1w.append(jnp.ones((1, d_model), jnp.float32))
        n1b.append(jnp.zeros((1, d_model), jnp.float32))
        n2w.append(jnp.ones((1, d_model), jnp.float32))
        n2b.append(jnp.zeros((1, d_model), jnp.float32))

    wf2d, bf_ = lin(keys[1 + n_layers], d_model * sequencelength, num_classes)
    wf = wf2d.reshape(sequencelength, d_model, num_classes)   # (T, d, C)
    stack = lambda xs: jnp.stack(xs, axis=0)
    return dict(
        w_in=w_in, b_in=b_in,
        wq=stack(wq), wk=stack(wk), wv=stack(wv),
        bq=stack(bq), bk=stack(bk), bv=stack(bv),
        wo=stack(wo), bo=stack(bo),
        n1w=stack(n1w), n1b=stack(n1b), w1=stack(w1), b1=stack(b1),
        w2=stack(w2), b2=stack(b2), n2w=stack(n2w), n2b=stack(n2b),
        nw=jnp.ones((1, d_model), jnp.float32),
        nb=jnp.zeros((1, d_model), jnp.float32),
        wf=wf, bf=bf_)


# ----------------------------- pure-JAX reference (f32) -----------------------

def reference_forward(x, params):
    B, T, _ = x.shape
    d = params["w_in"].shape[1]
    h = jnp.maximum(jnp.einsum('bti,id->btd', x, params["w_in"]) + params["b_in"], 0.0)
    scale = 1.0 / jnp.sqrt(jnp.float32(d))
    for l in range(params["wq"].shape[0]):
        q = jnp.einsum('btd,de->bte', h, params["wq"][l]) + params["bq"][l]
        k = jnp.einsum('btd,de->bte', h, params["wk"][l]) + params["bk"][l]
        v = jnp.einsum('btd,de->bte', h, params["wv"][l]) + params["bv"][l]
        s = jnp.einsum('btd,ctd->tbc', q, k) * scale       # attention over B axis
        p = jax.nn.softmax(s, axis=-1)
        a = jnp.einsum('tbc,ctd->btd', p, v)
        a = jnp.einsum('btd,de->bte', a, params["wo"][l]) + params["bo"][l]
        x1 = _layer_norm(h + a, params["n1w"][l], params["n1b"][l])
        f = jnp.maximum(jnp.einsum('btd,de->bte', x1, params["w1"][l]) + params["b1"][l], 0.0)
        f = jnp.einsum('bte,ed->btd', f, params["w2"][l]) + params["b2"][l]
        h = _layer_norm(x1 + f, params["n2w"][l], params["n2b"][l])
    h = jnp.maximum(_layer_norm(h, params["nw"], params["nb"]), 0.0)
    wf2d = params["wf"].reshape(T * d, -1)
    logits = h.reshape(B, T * d) @ wf2d + params["bf"]
    return jax.nn.log_softmax(logits, axis=-1)


if __name__ == "__main__":
    key = jax.random.PRNGKey(0)
    # Small shapes consistent with the module defaults (input_dim=13, n_head=1,
    # d_model=64, num_classes=9) at reduced depth / sequencelength / batch.
    B, T, Din = 8, 8, 13
    d_model, d_inner, n_layers, num_classes = 64, 128, 2, 9

    kx, kp = jax.random.split(key)
    x = jax.random.normal(kx, (B, T, Din), jnp.float32)
    params = init_params(kp, Din, d_model, d_inner, n_layers, T, num_classes)

    # t_block=2 -> grid=(4,), exercising the accumulate / init / finalize path.
    out = jax.block_until_ready(transformer_forward(x, params, t_block=2))

    assert out.shape == (B, num_classes)
    assert bool(jnp.all(jnp.isfinite(out)))
    # rows of log_softmax must sum to 1 in probability space
    assert bool(jnp.all(jnp.abs(jnp.sum(jnp.exp(out), axis=-1) - 1.0) < 1e-3))
    # cross-check against pure-f32 JAX reference (loose tol: bf16 MXU operands)
    with jax.default_matmul_precision("highest"):
        ref = reference_forward(x, params)
    assert bool(jnp.allclose(out, ref, atol=7e-2, rtol=7e-2))
    print("KERNEL_OK")
</pallas_src>

<mosaic_0001>
module attributes {stable_mosaic.version = 11 : i64} {
  func.func @fused_forward_kernel(%arg0: i32, %arg1: memref<2x8x13xf32, #tpu.memory_space<vmem>>, %arg2: memref<13x64xbf16, #tpu.memory_space<vmem>>, %arg3: memref<1x64xf32, #tpu.memory_space<vmem>>, %arg4: memref<2x64x64xbf16, #tpu.memory_space<vmem>>, %arg5: memref<2x64x64xbf16, #tpu.memory_space<vmem>>, %arg6: memref<2x64x64xbf16, #tpu.memory_space<vmem>>, %arg7: memref<2x1x64xf32, #tpu.memory_space<vmem>>, %arg8: memref<2x1x64xf32, #tpu.memory_space<vmem>>, %arg9: memref<2x1x64xf32, #tpu.memory_space<vmem>>, %arg10: memref<2x64x64xbf16, #tpu.memory_space<vmem>>, %arg11: memref<2x1x64xf32, #tpu.memory_space<vmem>>, %arg12: memref<2x1x64xf32, #tpu.memory_space<vmem>>, %arg13: memref<2x1x64xf32, #tpu.memory_space<vmem>>, %arg14: memref<2x64x128xbf16, #tpu.memory_space<vmem>>, %arg15: memref<2x1x128xf32, #tpu.memory_space<vmem>>, %arg16: memref<2x128x64xbf16, #tpu.memory_space<vmem>>, %arg17: memref<2x1x64xf32, #tpu.memory_space<vmem>>, %arg18: memref<2x1x64xf32, #tpu.memory_space<vmem>>, %arg19: memref<2x1x64xf32, #tpu.memory_space<vmem>>, %arg20: memref<1x64xf32, #tpu.memory_space<vmem>>, %arg21: memref<1x64xf32, #tpu.memory_space<vmem>>, %arg22: memref<2x64x9xbf16, #tpu.memory_space<vmem>>, %arg23: memref<1x9xf32, #tpu.memory_space<vmem>>, %arg24: memref<8x9xf32, #tpu.memory_space<vmem>>, %arg25: memref<8x9xf32, #tpu.memory_space<vmem>>) attributes {dimension_semantics = [#tpu.dimension_semantics<arbitrary>], iteration_bounds = array<i64: 4>, scalar_prefetch = 0 : i64, scratch_operands = 1 : i64, tpu.core_type = #tpu.core_type<tc>, window_params = [{transform_indices = @transform_0, window_bounds = array<i64: 2, 8, 13>}, {pipeline_mode = #tpu.pipeline_mode<synchronous>, transform_indices = @transform_1, window_bounds = array<i64: 13, 64>}, {pipeline_mode = #tpu.pipeline_mode<synchronous>, transform_indices = @transform_2, window_bounds = array<i64: 1, 64>}, {pipeline_mode = #tpu.pipeline_mode<synchronous>, transform_indices = @transform_3, window_bounds = array<i64: 2, 64, 64>}, {pipeline_mode = #tpu.pipeline_mode<synchronous>, transform_indices = @transform_4, window_bounds = array<i64: 2, 64, 64>}, {pipeline_mode = #tpu.pipeline_mode<synchronous>, transform_indices = @transform_5, window_bounds = array<i64: 2, 64, 64>}, {pipeline_mode = #tpu.pipeline_mode<synchronous>, transform_indices = @transform_6, window_bounds = array<i64: 2, 1, 64>}, {pipeline_mode = #tpu.pipeline_mode<synchronous>, transform_indices = @transform_7, window_bounds = array<i64: 2, 1, 64>}, {pipeline_mode = #tpu.pipeline_mode<synchronous>, transform_indices = @transform_8, window_bounds = array<i64: 2, 1, 64>}, {pipeline_mode = #tpu.pipeline_mode<synchronous>, transform_indices = @transform_9, window_bounds = array<i64: 2, 64, 64>}, {pipeline_mode = #tpu.pipeline_mode<synchronous>, transform_indices = @transform_10, window_bounds = array<i64: 2, 1, 64>}, {pipeline_mode = #tpu.pipeline_mode<synchronous>, transform_indices = @transform_11, window_bounds = array<i64: 2, 1, 64>}, {pipeline_mode = #tpu.pipeline_mode<synchronous>, transform_indices = @transform_12, window_bounds = array<i64: 2, 1, 64>}, {pipeline_mode = #tpu.pipeline_mode<synchronous>, transform_indices = @transform_13, window_bounds = array<i64: 2, 64, 128>}, {pipeline_mode = #tpu.pipeline_mode<synchronous>, transform_indices = @transform_14, window_bounds = array<i64: 2, 1, 128>}, {pipeline_mode = #tpu.pipeline_mode<synchronous>, transform_indices = @transform_15, window_bounds = array<i64: 2, 128, 64>}, {pipeline_mode = #tpu.pipeline_mode<synchronous>, transform_indices = @transform_16, window_bounds = array<i64: 2, 1, 64>}, {pipeline_mode = #tpu.pipeline_mode<synchronous>, transform_indices = @transform_17, window_bounds = array<i64: 2, 1, 64>}, {pipeline_mode = #tpu.pipeline_mode<synchronous>, transform_indices = @transform_18, window_bounds = array<i64: 2, 1, 64>}, {pipeline_mode = #tpu.pipeline_mode<synchronous>, transform_indices = @transform_19, window_bounds = array<i64: 1, 64>}, {pipeline_mode = #tpu.pipeline_mode<synchronous>, transform_indices = @transform_20, window_bounds = array<i64: 1, 64>}, {transform_indices = @transform_21, window_bounds = array<i64: 2, 64, 9>}, {pipeline_mode = #tpu.pipeline_mode<synchronous>, transform_indices = @transform_22, window_bounds = array<i64: 1, 9>}, {pipeline_mode = #tpu.pipeline_mode<synchronous>, transform_indices = @transform_23, window_bounds = array<i64: 8, 9>}]} {
    %c0_i32 = arith.constant 0 : i32
    %0 = arith.cmpi eq, %arg0, %c0_i32 : i32
    %1 = arith.extui %0 : i1 to i32
    %c0_i32_0 = arith.constant 0 : i32
    %2 = arith.cmpi ne, %1, %c0_i32_0 : i32
    scf.if %2 {
      %cst_167 = arith.constant 0.000000e+00 : f32
      %298 = vector.broadcast %cst_167 : f32 to vector<8x9xf32>
      %c0_168 = arith.constant 0 : index
      %c0_169 = arith.constant 0 : index
      %299 = vector.load %arg25[%c0_168, %c0_169] : memref<8x9xf32, #tpu.memory_space<vmem>>, vector<8x9xf32>
      tpu.vector_store %arg25[%c0_168, %c0_169], %298 {strides = array<i32>} : memref<8x9xf32, #tpu.memory_space<vmem>>, vector<8x9xf32>,
    } else {
    }
    %c0 = arith.constant 0 : index
    %c0_1 = arith.constant 0 : index
    %c0_2 = arith.constant 0 : index
    %3 = vector.load %arg1[%c0, %c0_1, %c0_2] : memref<2x8x13xf32, #tpu.memory_space<vmem>>, vector<2x8x13xf32>
    %4 = vector.shape_cast %3 : vector<2x8x13xf32> to vector<16x13xf32>
    %5 = arith.truncf %4 : vector<16x13xf32> to vector<16x13xbf16>
    %c0_3 = arith.constant 0 : index
    %c0_4 = arith.constant 0 : index
    %6 = vector.load %arg2[%c0_3, %c0_4] : memref<13x64xbf16, #tpu.memory_space<vmem>>, vector<13x64xbf16>
    %cst = arith.constant dense<0.000000e+00> : vector<16x64xf32>
    %7 = tpu.matmul %5, %6, %cst {dimension_numbers = #tpu.dot_dimension_numbers<[1], [0], [0], [1], [0, 0, 1, 1], [], []>} : vector<16x13xbf16>, vector<13x64xbf16>, vector<16x64xf32> -> vector<16x64xf32>
    %c0_5 = arith.constant 0 : index
    %c0_6 = arith.constant 0 : index
    %8 = vector.load %arg3[%c0_5, %c0_6] : memref<1x64xf32, #tpu.memory_space<vmem>>, vector<1x64xf32>
    %9 = vector.broadcast %8 : vector<1x64xf32> to vector<16x64xf32>
    %10 = arith.addf %7, %9 : vector<16x64xf32>
    %cst_7 = arith.constant 0.000000e+00 : f32
    %11 = vector.broadcast %cst_7 : f32 to vector<16x64xf32>
    %12 = arith.maximumf %10, %11 : vector<16x64xf32>
    %cst_8 = arith.constant 6.400000e+01 : f32
    %13 = math.sqrt %cst_8 : f32
    %cst_9 = arith.constant 1.000000e+00 : f32
    %14 = arith.divf %cst_9, %13 : f32
    %15 = arith.truncf %12 : vector<16x64xf32> to vector<16x64xbf16>
    %c0_10 = arith.constant 0 : index
    %c0_11 = arith.constant 0 : index
    %c0_12 = arith.constant 0 : index
    %16 = vector.load %arg4[%c0_10, %c0_11, %c0_12] : memref<2x64x64xbf16, #tpu.memory_space<vmem>>, vector<1x64x64xbf16>
    %17 = vector.shape_cast %16 : vector<1x64x64xbf16> to vector<64x64xbf16>
    %cst_13 = arith.constant dense<0.000000e+00> : vector<16x64xf32>
    %18 = tpu.matmul %15, %17, %cst_13 {dimension_numbers = #tpu.dot_dimension_numbers<[1], [0], [0], [1], [0, 0, 1, 1], [], []>} : vector<16x64xbf16>, vector<64x64xbf16>, vector<16x64xf32> -> vector<16x64xf32>
    %c0_14 = arith.constant 0 : index
    %c0_15 = arith.constant 0 : index
    %c0_16 = arith.constant 0 : index
    %19 = vector.load %arg7[%c0_14, %c0_15, %c0_16] : memref<2x1x64xf32, #tpu.memory_space<vmem>>, vector<1x1x64xf32>
    %20 = vector.shape_cast %19 : vector<1x1x64xf32> to vector<1x64xf32>
    %21 = vector.broadcast %20 : vector<1x64xf32> to vector<16x64xf32>
    %22 = arith.addf %18, %21 : vector<16x64xf32>
    %c0_17 = arith.constant 0 : index
    %c0_18 = arith.constant 0 : index
    %c0_19 = arith.constant 0 : index
    %23 = vector.load %arg5[%c0_17, %c0_18, %c0_19] : memref<2x64x64xbf16, #tpu.memory_space<vmem>>, vector<1x64x64xbf16>
    %24 = vector.shape_cast %23 : vector<1x64x64xbf16> to vector<64x64xbf16>
    %cst_20 = arith.constant dense<0.000000e+00> : vector<16x64xf32>
    %25 = tpu.matmul %15, %24, %cst_20 {dimension_numbers = #tpu.dot_dimension_numbers<[1], [0], [0], [1], [0, 0, 1, 1], [], []>} : vector<16x64xbf16>, vector<64x64xbf16>, vector<16x64xf32> -> vector<16x64xf32>
    %c0_21 = arith.constant 0 : index
    %c0_22 = arith.constant 0 : index
    %c0_23 = arith.constant 0 : index
    %26 = vector.load %arg8[%c0_21, %c0_22, %c0_23] : memref<2x1x64xf32, #tpu.memory_space<vmem>>, vector<1x1x64xf32>
    %27 = vector.shape_cast %26 : vector<1x1x64xf32> to vector<1x64xf32>
    %28 = vector.broadcast %27 : vector<1x64xf32> to vector<16x64xf32>
    %29 = arith.addf %25, %28 : vector<16x64xf32>
    %c0_24 = arith.constant 0 : index
    %c0_25 = arith.constant 0 : index
    %c0_26 = arith.constant 0 : index
    %30 = vector.load %arg6[%c0_24, %c0_25, %c0_26] : memref<2x64x64xbf16, #tpu.memory_space<vmem>>, vector<1x64x64xbf16>
    %31 = vector.shape_cast %30 : vector<1x64x64xbf16> to vector<64x64xbf16>
    %cst_27 = arith.constant dense<0.000000e+00> : vector<16x64xf32>
    %32 = tpu.matmul %15, %31, %cst_27 {dimension_numbers = #tpu.dot_dimension_numbers<[1], [0], [0], [1], [0, 0, 1, 1], [], []>} : vector<16x64xbf16>, vector<64x64xbf16>, vector<16x64xf32> -> vector<16x64xf32>
    %c0_28 = arith.constant 0 : index
    %c0_29 = arith.constant 0 : index
    %c0_30 = arith.constant 0 : index
    %33 = vector.load %arg9[%c0_28, %c0_29, %c0_30] : memref<2x1x64xf32, #tpu.memory_space<vmem>>, vector<1x1x64xf32>
    %34 = vector.shape_cast %33 : vector<1x1x64xf32> to vector<1x64xf32>
    %35 = vector.broadcast %34 : vector<1x64xf32> to vector<16x64xf32>
    %36 = arith.addf %32, %35 : vector<16x64xf32>
    %37 = vector.shape_cast %22 : vector<16x64xf32> to vector<2x8x64xf32>
    %38 = arith.truncf %37 : vector<2x8x64xf32> to vector<2x8x64xbf16>
    %39 = vector.shape_cast %29 : vector<16x64xf32> to vector<2x8x64xf32>
    %40 = arith.truncf %39 : vector<2x8x64xf32> to vector<2x8x64xbf16>
    %41 = vector.shape_cast %36 : vector<16x64xf32> to vector<2x8x64xf32>
    %42 = arith.truncf %41 : vector<2x8x64xf32> to vector<2x8x64xbf16>
    "tpu.trace_start"() <{level = 10 : i32, message = "tbd,tcd->tbc"}> : () -> ()
    %cst_31 = arith.constant dense<0.000000e+00> : vector<2x8x8xf32>
    %43 = tpu.matmul %38, %40, %cst_31 {dimension_numbers = #tpu.dot_dimension_numbers<[2], [2], [1], [1], [0, 0, 0, 1, 1, 1], [0], [0]>} : vector<2x8x64xbf16>, vector<2x8x64xbf16>, vector<2x8x8xf32> -> vector<2x8x8xf32>
    "tpu.trace_stop"() : () -> ()
    %44 = vector.broadcast %14 : f32 to vector<2x8x8xf32>
    %45 = arith.mulf %43, %44 : vector<2x8x8xf32>
    %cst_32 = arith.constant dense<0xFF800000> : vector<2x8xf32>
    %46 = vector.multi_reduction <maximumf>, %45, %cst_32 [2] : vector<2x8x8xf32> to vector<2x8xf32>
    %47 = vector.shape_cast %46 : vector<2x8xf32> to vector<2x8x1xf32>
    %48 = vector.broadcast %47 : vector<2x8x1xf32> to vector<2x8x8xf32>
    %49 = arith.subf %45, %48 : vector<2x8x8xf32>
    %50 = math.exp %49 : vector<2x8x8xf32>
    %cst_33 = arith.constant dense<0.000000e+00> : vector<2x8xf32>
    %51 = vector.multi_reduction <add>, %50, %cst_33 [2] : vector<2x8x8xf32> to vector<2x8xf32>
    %52 = vector.shape_cast %51 : vector<2x8xf32> to vector<2x8x1xf32>
    %53 = vector.broadcast %52 : vector<2x8x1xf32> to vector<2x8x8xf32>
    %54 = arith.divf %50, %53 : vector<2x8x8xf32>
    %55 = arith.truncf %54 : vector<2x8x8xf32> to vector<2x8x8xbf16>
    "tpu.trace_start"() <{level = 10 : i32, message = "tbc,tcd->tbd"}> : () -> ()
    %cst_34 = arith.constant dense<0.000000e+00> : vector<2x8x64xf32>
    %56 = tpu.matmul %55, %42, %cst_34 {dimension_numbers = #tpu.dot_dimension_numbers<[2], [1], [1], [2], [0, 0, 0, 1, 1, 2], [0], [0]>} : vector<2x8x8xbf16>, vector<2x8x64xbf16>, vector<2x8x64xf32> -> vector<2x8x64xf32>
    "tpu.trace_stop"() : () -> ()
    %57 = vector.shape_cast %56 : vector<2x8x64xf32> to vector<16x64xf32>
    %58 = arith.truncf %57 : vector<16x64xf32> to vector<16x64xbf16>
    %c0_35 = arith.constant 0 : index
    %c0_36 = arith.constant 0 : index
    %c0_37 = arith.constant 0 : index
    %59 = vector.load %arg10[%c0_35, %c0_36, %c0_37] : memref<2x64x64xbf16, #tpu.memory_space<vmem>>, vector<1x64x64xbf16>
    %60 = vector.shape_cast %59 : vector<1x64x64xbf16> to vector<64x64xbf16>
    %cst_38 = arith.constant dense<0.000000e+00> : vector<16x64xf32>
    %61 = tpu.matmul %58, %60, %cst_38 {dimension_numbers = #tpu.dot_dimension_numbers<[1], [0], [0], [1], [0, 0, 1, 1], [], []>} : vector<16x64xbf16>, vector<64x64xbf16>, vector<16x64xf32> -> vector<16x64xf32>
    %c0_39 = arith.constant 0 : index
    %c0_40 = arith.constant 0 : index
    %c0_41 = arith.constant 0 : index
    %62 = vector.load %arg11[%c0_39, %c0_40, %c0_41] : memref<2x1x64xf32, #tpu.memory_space<vmem>>, vector<1x1x64xf32>
    %63 = vector.shape_cast %62 : vector<1x1x64xf32> to vector<1x64xf32>
    %64 = vector.broadcast %63 : vector<1x64xf32> to vector<16x64xf32>
    %65 = arith.addf %61, %64 : vector<16x64xf32>
    %66 = arith.addf %12, %65 : vector<16x64xf32>
    %c0_42 = arith.constant 0 : index
    %c0_43 = arith.constant 0 : index
    %c0_44 = arith.constant 0 : index
    %67 = vector.load %arg12[%c0_42, %c0_43, %c0_44] : memref<2x1x64xf32, #tpu.memory_space<vmem>>, vector<1x1x64xf32>
    %68 = vector.shape_cast %67 : vector<1x1x64xf32> to vector<1x64xf32>
    %c0_45 = arith.constant 0 : index
    %c0_46 = arith.constant 0 : index
    %c0_47 = arith.constant 0 : index
    %69 = vector.load %arg13[%c0_45, %c0_46, %c0_47] : memref<2x1x64xf32, #tpu.memory_space<vmem>>, vector<1x1x64xf32>
    %70 = vector.shape_cast %69 : vector<1x1x64xf32> to vector<1x64xf32>
    %cst_48 = arith.constant dense<0.000000e+00> : vector<16xf32>
    %71 = vector.multi_reduction <add>, %66, %cst_48 [1] : vector<16x64xf32> to vector<16xf32>
    %72 = vector.shape_cast %71 : vector<16xf32> to vector<16x1xf32>
    %cst_49 = arith.constant 6.400000e+01 : f32
    %73 = vector.broadcast %cst_49 : f32 to vector<16x1xf32>
    %74 = arith.divf %72, %73 : vector<16x1xf32>
    %75 = arith.mulf %66, %66 : vector<16x64xf32>
    %cst_50 = arith.constant dense<0.000000e+00> : vector<16xf32>
    %76 = vector.multi_reduction <add>, %75, %cst_50 [1] : vector<16x64xf32> to vector<16xf32>
    %77 = vector.shape_cast %76 : vector<16xf32> to vector<16x1xf32>
    %cst_51 = arith.constant 6.400000e+01 : f32
    %78 = vector.broadcast %cst_51 : f32 to vector<16x1xf32>
    %79 = arith.divf %77, %78 : vector<16x1xf32>
    %80 = arith.mulf %74, %74 : vector<16x1xf32>
    %81 = arith.subf %79, %80 : vector<16x1xf32>
    %82 = vector.broadcast %74 : vector<16x1xf32> to vector<16x64xf32>
    %83 = arith.subf %66, %82 : vector<16x64xf32>
    %cst_52 = arith.constant 9.99999974E-6 : f32
    %84 = vector.broadcast %cst_52 : f32 to vector<16x1xf32>
    %85 = arith.addf %81, %84 : vector<16x1xf32>
    %86 = math.rsqrt %85 : vector<16x1xf32>
    %87 = vector.broadcast %86 : vector<16x1xf32> to vector<16x64xf32>
    %88 = arith.mulf %83, %87 : vector<16x64xf32>
    %89 = vector.broadcast %68 : vector<1x64xf32> to vector<16x64xf32>
    %90 = arith.mulf %88, %89 : vector<16x64xf32>
    %91 = vector.broadcast %70 : vector<1x64xf32> to vector<16x64xf32>
    %92 = arith.addf %90, %91 : vector<16x64xf32>
    %93 = arith.truncf %92 : vector<16x64xf32> to vector<16x64xbf16>
    %c0_53 = arith.constant 0 : index
    %c0_54 = arith.constant 0 : index
    %c0_55 = arith.constant 0 : index
    %94 = vector.load %arg14[%c0_53, %c0_54, %c0_55] : memref<2x64x128xbf16, #tpu.memory_space<vmem>>, vector<1x64x128xbf16>
    %95 = vector.shape_cast %94 : vector<1x64x128xbf16> to vector<64x128xbf16>
    %cst_56 = arith.constant dense<0.000000e+00> : vector<16x128xf32>
    %96 = tpu.matmul %93, %95, %cst_56 {dimension_numbers = #tpu.dot_dimension_numbers<[1], [0], [0], [1], [0, 0, 1, 1], [], []>} : vector<16x64xbf16>, vector<64x128xbf16>, vector<16x128xf32> -> vector<16x128xf32>
    %c0_57 = arith.constant 0 : index
    %c0_58 = arith.constant 0 : index
    %c0_59 = arith.constant 0 : index
    %97 = vector.load %arg15[%c0_57, %c0_58, %c0_59] : memref<2x1x128xf32, #tpu.memory_space<vmem>>, vector<1x1x128xf32>
    %98 = vector.shape_cast %97 : vector<1x1x128xf32> to vector<1x128xf32>
    %99 = vector.broadcast %98 : vector<1x128xf32> to vector<16x128xf32>
    %100 = arith.addf %96, %99 : vector<16x128xf32>
    %cst_60 = arith.constant 0.000000e+00 : f32
    %101 = vector.broadcast %cst_60 : f32 to vector<16x128xf32>
    %102 = arith.maximumf %100, %101 : vector<16x128xf32>
    %103 = arith.truncf %102 : vector<16x128xf32> to vector<16x128xbf16>
    %c0_61 = arith.constant 0 : index
    %c0_62 = arith.constant 0 : index
    %c0_63 = arith.constant 0 : index
    %104 = vector.load %arg16[%c0_61, %c0_62, %c0_63] : memref<2x128x64xbf16, #tpu.memory_space<vmem>>, vector<1x128x64xbf16>
    %105 = vector.shape_cast %104 : vector<1x128x64xbf16> to vector<128x64xbf16>
    %cst_64 = arith.constant dense<0.000000e+00> : vector<16x64xf32>
    %106 = tpu.matmul %103, %105, %cst_64 {dimension_numbers = #tpu.dot_dimension_numbers<[1], [0], [0], [1], [0, 0, 1, 1], [], []>} : vector<16x128xbf16>, vector<128x64xbf16>, vector<16x64xf32> -> vector<16x64xf32>
    %c0_65 = arith.constant 0 : index
    %c0_66 = arith.constant 0 : index
    %c0_67 = arith.constant 0 : index
    %107 = vector.load %arg17[%c0_65, %c0_66, %c0_67] : memref<2x1x64xf32, #tpu.memory_space<vmem>>, vector<1x1x64xf32>
    %108 = vector.shape_cast %107 : vector<1x1x64xf32> to vector<1x64xf32>
    %109 = vector.broadcast %108 : vector<1x64xf32> to vector<16x64xf32>
    %110 = arith.addf %106, %109 : vector<16x64xf32>
    %111 = arith.addf %92, %110 : vector<16x64xf32>
    %c0_68 = arith.constant 0 : index
    %c0_69 = arith.constant 0 : index
    %c0_70 = arith.constant 0 : index
    %112 = vector.load %arg18[%c0_68, %c0_69, %c0_70] : memref<2x1x64xf32, #tpu.memory_space<vmem>>, vector<1x1x64xf32>
    %113 = vector.shape_cast %112 : vector<1x1x64xf32> to vector<1x64xf32>
    %c0_71 = arith.constant 0 : index
    %c0_72 = arith.constant 0 : index
    %c0_73 = arith.constant 0 : index
    %114 = vector.load %arg19[%c0_71, %c0_72, %c0_73] : memref<2x1x64xf32, #tpu.memory_space<vmem>>, vector<1x1x64xf32>
    %115 = vector.shape_cast %114 : vector<1x1x64xf32> to vector<1x64xf32>
    %cst_74 = arith.constant dense<0.000000e+00> : vector<16xf32>
    %116 = vector.multi_reduction <add>, %111, %cst_74 [1] : vector<16x64xf32> to vector<16xf32>
    %117 = vector.shape_cast %116 : vector<16xf32> to vector<16x1xf32>
    %cst_75 = arith.constant 6.400000e+01 : f32
    %118 = vector.broadcast %cst_75 : f32 to vector<16x1xf32>
    %119 = arith.divf %117, %118 : vector<16x1xf32>
    %120 = arith.mulf %111, %111 : vector<16x64xf32>
    %cst_76 = arith.constant dense<0.000000e+00> : vector<16xf32>
    %121 = vector.multi_reduction <add>, %120, %cst_76 [1] : vector<16x64xf32> to vector<16xf32>
    %122 = vector.shape_cast %121 : vector<16xf32> to vector<16x1xf32>
    %cst_77 = arith.constant 6.400000e+01 : f32
    %123 = vector.broadcast %cst_77 : f32 to vector<16x1xf32>
    %124 = arith.divf %122, %123 : vector<16x1xf32>
    %125 = arith.mulf %119, %119 : vector<16x1xf32>
    %126 = arith.subf %124, %125 : vector<16x1xf32>
    %127 = vector.broadcast %119 : vector<16x1xf32> to vector<16x64xf32>
    %128 = arith.subf %111, %127 : vector<16x64xf32>
    %cst_78 = arith.constant 9.99999974E-6 : f32
    %129 = vector.broadcast %cst_78 : f32 to vector<16x1xf32>
    %130 = arith.addf %126, %129 : vector<16x1xf32>
    %131 = math.rsqrt %130 : vector<16x1xf32>
    %132 = vector.broadcast %131 : vector<16x1xf32> to vector<16x64xf32>
    %133 = arith.mulf %128, %132 : vector<16x64xf32>
    %134 = vector.broadcast %113 : vector<1x64xf32> to vector<16x64xf32>
    %135 = arith.mulf %133, %134 : vector<16x64xf32>
    %136 = vector.broadcast %115 : vector<1x64xf32> to vector<16x64xf32>
    %137 = arith.addf %135, %136 : vector<16x64xf32>
    %138 = arith.truncf %137 : vector<16x64xf32> to vector<16x64xbf16>
    %c1 = arith.constant 1 : index
    %c0_79 = arith.constant 0 : index
    %c0_80 = arith.constant 0 : index
    %139 = vector.load %arg4[%c1, %c0_79, %c0_80] : memref<2x64x64xbf16, #tpu.memory_space<vmem>>, vector<1x64x64xbf16>
    %140 = vector.shape_cast %139 : vector<1x64x64xbf16> to vector<64x64xbf16>
    %cst_81 = arith.constant dense<0.000000e+00> : vector<16x64xf32>
    %141 = tpu.matmul %138, %140, %cst_81 {dimension_numbers = #tpu.dot_dimension_numbers<[1], [0], [0], [1], [0, 0, 1, 1], [], []>} : vector<16x64xbf16>, vector<64x64xbf16>, vector<16x64xf32> -> vector<16x64xf32>
    %c1_82 = arith.constant 1 : index
    %c0_83 = arith.constant 0 : index
    %c0_84 = arith.constant 0 : index
    %142 = vector.load %arg7[%c1_82, %c0_83, %c0_84] : memref<2x1x64xf32, #tpu.memory_space<vmem>>, vector<1x1x64xf32>
    %143 = vector.shape_cast %142 : vector<1x1x64xf32> to vector<1x64xf32>
    %144 = vector.broadcast %143 : vector<1x64xf32> to vector<16x64xf32>
    %145 = arith.addf %141, %144 : vector<16x64xf32>
    %c1_85 = arith.constant 1 : index
    %c0_86 = arith.constant 0 : index
    %c0_87 = arith.constant 0 : index
    %146 = vector.load %arg5[%c1_85, %c0_86, %c0_87] : memref<2x64x64xbf16, #tpu.memory_space<vmem>>, vector<1x64x64xbf16>
    %147 = vector.shape_cast %146 : vector<1x64x64xbf16> to vector<64x64xbf16>
    %cst_88 = arith.constant dense<0.000000e+00> : vector<16x64xf32>
    %148 = tpu.matmul %138, %147, %cst_88 {dimension_numbers = #tpu.dot_dimension_numbers<[1], [0], [0], [1], [0, 0, 1, 1], [], []>} : vector<16x64xbf16>, vector<64x64xbf16>, vector<16x64xf32> -> vector<16x64xf32>
    %c1_89 = arith.constant 1 : index
    %c0_90 = arith.constant 0 : index
    %c0_91 = arith.constant 0 : index
    %149 = vector.load %arg8[%c1_89, %c0_90, %c0_91] : memref<2x1x64xf32, #tpu.memory_space<vmem>>, vector<1x1x64xf32>
    %150 = vector.shape_cast %149 : vector<1x1x64xf32> to vector<1x64xf32>
    %151 = vector.broadcast %150 : vector<1x64xf32> to vector<16x64xf32>
    %152 = arith.addf %148, %151 : vector<16x64xf32>
    %c1_92 = arith.constant 1 : index
    %c0_93 = arith.constant 0 : index
    %c0_94 = arith.constant 0 : index
    %153 = vector.load %arg6[%c1_92, %c0_93, %c0_94] : memref<2x64x64xbf16, #tpu.memory_space<vmem>>, vector<1x64x64xbf16>
    %154 = vector.shape_cast %153 : vector<1x64x64xbf16> to vector<64x64xbf16>
    %cst_95 = arith.constant dense<0.000000e+00> : vector<16x64xf32>
    %155 = tpu.matmul %138, %154, %cst_95 {dimension_numbers = #tpu.dot_dimension_numbers<[1], [0], [0], [1], [0, 0, 1, 1], [], []>} : vector<16x64xbf16>, vector<64x64xbf16>, vector<16x64xf32> -> vector<16x64xf32>
    %c1_96 = arith.constant 1 : index
    %c0_97 = arith.constant 0 : index
    %c0_98 = arith.constant 0 : index
    %156 = vector.load %arg9[%c1_96, %c0_97, %c0_98] : memref<2x1x64xf32, #tpu.memory_space<vmem>>, vector<1x1x64xf32>
    %157 = vector.shape_cast %156 : vector<1x1x64xf32> to vector<1x64xf32>
    %158 = vector.broadcast %157 : vector<1x64xf32> to vector<16x64xf32>
    %159 = arith.addf %155, %158 : vector<16x64xf32>
    %160 = vector.shape_cast %145 : vector<16x64xf32> to vector<2x8x64xf32>
    %161 = arith.truncf %160 : vector<2x8x64xf32> to vector<2x8x64xbf16>
    %162 = vector.shape_cast %152 : vector<16x64xf32> to vector<2x8x64xf32>
    %163 = arith.truncf %162 : vector<2x8x64xf32> to vector<2x8x64xbf16>
    %164 = vector.shape_cast %159 : vector<16x64xf32> to vector<2x8x64xf32>
    %165 = arith.truncf %164 : vector<2x8x64xf32> to vector<2x8x64xbf16>
    "tpu.trace_start"() <{level = 10 : i32, message = "tbd,tcd->tbc"}> : () -> ()
    %cst_99 = arith.constant dense<0.000000e+00> : vector<2x8x8xf32>
    %166 = tpu.matmul %161, %163, %cst_99 {dimension_numbers = #tpu.dot_dimension_numbers<[2], [2], [1], [1], [0, 0, 0, 1, 1, 1], [0], [0]>} : vector<2x8x64xbf16>, vector<2x8x64xbf16>, vector<2x8x8xf32> -> vector<2x8x8xf32>
    "tpu.trace_stop"() : () -> ()
    %167 = vector.broadcast %14 : f32 to vector<2x8x8xf32>
    %168 = arith.mulf %166, %167 : vector<2x8x8xf32>
    %cst_100 = arith.constant dense<0xFF800000> : vector<2x8xf32>
    %169 = vector.multi_reduction <maximumf>, %168, %cst_100 [2] : vector<2x8x8xf32> to vector<2x8xf32>
    %170 = vector.shape_cast %169 : vector<2x8xf32> to vector<2x8x1xf32>
    %171 = vector.broadcast %170 : vector<2x8x1xf32> to vector<2x8x8xf32>
    %172 = arith.subf %168, %171 : vector<2x8x8xf32>
    %173 = math.exp %172 : vector<2x8x8xf32>
    %cst_101 = arith.constant dense<0.000000e+00> : vector<2x8xf32>
    %174 = vector.multi_reduction <add>, %173, %cst_101 [2] : vector<2x8x8xf32> to vector<2x8xf32>
    %175 = vector.shape_cast %174 : vector<2x8xf32> to vector<2x8x1xf32>
    %176 = vector.broadcast %175 : vector<2x8x1xf32> to vector<2x8x8xf32>
    %177 = arith.divf %173, %176 : vector<2x8x8xf32>
    %178 = arith.truncf %177 : vector<2x8x8xf32> to vector<2x8x8xbf16>
    "tpu.trace_start"() <{level = 10 : i32, message = "tbc,tcd->tbd"}> : () -> ()
    %cst_102 = arith.constant dense<0.000000e+00> : vector<2x8x64xf32>
    %179 = tpu.matmul %178, %165, %cst_102 {dimension_numbers = #tpu.dot_dimension_numbers<[2], [1], [1], [2], [0, 0, 0, 1, 1, 2], [0], [0]>} : vector<2x8x8xbf16>, vector<2x8x64xbf16>, vector<2x8x64xf32> -> vector<2x8x64xf32>
    "tpu.trace_stop"() : () -> ()
    %180 = vector.shape_cast %179 : vector<2x8x64xf32> to vector<16x64xf32>
    %181 = arith.truncf %180 : vector<16x64xf32> to vector<16x64xbf16>
    %c1_103 = arith.constant 1 : index
    %c0_104 = arith.constant 0 : index
    %c0_105 = arith.constant 0 : index
    %182 = vector.load %arg10[%c1_103, %c0_104, %c0_105] : memref<2x64x64xbf16, #tpu.memory_space<vmem>>, vector<1x64x64xbf16>
    %183 = vector.shape_cast %182 : vector<1x64x64xbf16> to vector<64x64xbf16>
    %cst_106 = arith.constant dense<0.000000e+00> : vector<16x64xf32>
    %184 = tpu.matmul %181, %183, %cst_106 {dimension_numbers = #tpu.dot_dimension_numbers<[1], [0], [0], [1], [0, 0, 1, 1], [], []>} : vector<16x64xbf16>, vector<64x64xbf16>, vector<16x64xf32> -> vector<16x64xf32>
    %c1_107 = arith.constant 1 : index
    %c0_108 = arith.constant 0 : index
    %c0_109 = arith.constant 0 : index
    %185 = vector.load %arg11[%c1_107, %c0_108, %c0_109] : memref<2x1x64xf32, #tpu.memory_space<vmem>>, vector<1x1x64xf32>
    %186 = vector.shape_cast %185 : vector<1x1x64xf32> to vector<1x64xf32>
    %187 = vector.broadcast %186 : vector<1x64xf32> to vector<16x64xf32>
    %188 = arith.addf %184, %187 : vector<16x64xf32>
    %189 = arith.addf %137, %188 : vector<16x64xf32>
    %c1_110 = arith.constant 1 : index
    %c0_111 = arith.constant 0 : index
    %c0_112 = arith.constant 0 : index
    %190 = vector.load %arg12[%c1_110, %c0_111, %c0_112] : memref<2x1x64xf32, #tpu.memory_space<vmem>>, vector<1x1x64xf32>
    %191 = vector.shape_cast %190 : vector<1x1x64xf32> to vector<1x64xf32>
    %c1_113 = arith.constant 1 : index
    %c0_114 = arith.constant 0 : index
    %c0_115 = arith.constant 0 : index
    %192 = vector.load %arg13[%c1_113, %c0_114, %c0_115] : memref<2x1x64xf32, #tpu.memory_space<vmem>>, vector<1x1x64xf32>
    %193 = vector.shape_cast %192 : vector<1x1x64xf32> to vector<1x64xf32>
    %cst_116 = arith.constant dense<0.000000e+00> : vector<16xf32>
    %194 = vector.multi_reduction <add>, %189, %cst_116 [1] : vector<16x64xf32> to vector<16xf32>
    %195 = vector.shape_cast %194 : vector<16xf32> to vector<16x1xf32>
    %cst_117 = arith.constant 6.400000e+01 : f32
    %196 = vector.broadcast %cst_117 : f32 to vector<16x1xf32>
    %197 = arith.divf %195, %196 : vector<16x1xf32>
    %198 = arith.mulf %189, %189 : vector<16x64xf32>
    %cst_118 = arith.constant dense<0.000000e+00> : vector<16xf32>
    %199 = vector.multi_reduction <add>, %198, %cst_118 [1] : vector<16x64xf32> to vector<16xf32>
    %200 = vector.shape_cast %199 : vector<16xf32> to vector<16x1xf32>
    %cst_119 = arith.constant 6.400000e+01 : f32
    %201 = vector.broadcast %cst_119 : f32 to vector<16x1xf32>
    %202 = arith.divf %200, %201 : vector<16x1xf32>
    %203 = arith.mulf %197, %197 : vector<16x1xf32>
    %204 = arith.subf %202, %203 : vector<16x1xf32>
    %205 = vector.broadcast %197 : vector<16x1xf32> to vector<16x64xf32>
    %206 = arith.subf %189, %205 : vector<16x64xf32>
    %cst_120 = arith.constant 9.99999974E-6 : f32
    %207 = vector.broadcast %cst_120 : f32 to vector<16x1xf32>
    %208 = arith.addf %204, %207 : vector<16x1xf32>
    %209 = math.rsqrt %208 : vector<16x1xf32>
    %210 = vector.broadcast %209 : vector<16x1xf32> to vector<16x64xf32>
    %211 = arith.mulf %206, %210 : vector<16x64xf32>
    %212 = vector.broadcast %191 : vector<1x64xf32> to vector<16x64xf32>
    %213 = arith.mulf %211, %212 : vector<16x64xf32>
    %214 = vector.broadcast %193 : vector<1x64xf32> to vector<16x64xf32>
    %215 = arith.addf %213, %214 : vector<16x64xf32>
    %216 = arith.truncf %215 : vector<16x64xf32> to vector<16x64xbf16>
    %c1_121 = arith.constant 1 : index
    %c0_122 = arith.constant 0 : index
    %c0_123 = arith.constant 0 : index
    %217 = vector.load %arg14[%c1_121, %c0_122, %c0_123] : memref<2x64x128xbf16, #tpu.memory_space<vmem>>, vector<1x64x128xbf16>
    %218 = vector.shape_cast %217 : vector<1x64x128xbf16> to vector<64x128xbf16>
    %cst_124 = arith.constant dense<0.000000e+00> : vector<16x128xf32>
    %219 = tpu.matmul %216, %218, %cst_124 {dimension_numbers = #tpu.dot_dimension_numbers<[1], [0], [0], [1], [0, 0, 1, 1], [], []>} : vector<16x64xbf16>, vector<64x128xbf16>, vector<16x128xf32> -> vector<16x128xf32>
    %c1_125 = arith.constant 1 : index
    %c0_126 = arith.constant 0 : index
    %c0_127 = arith.constant 0 : index
    %220 = vector.load %arg15[%c1_125, %c0_126, %c0_127] : memref<2x1x128xf32, #tpu.memory_space<vmem>>, vector<1x1x128xf32>
    %221 = vector.shape_cast %220 : vector<1x1x128xf32> to vector<1x128xf32>
    %222 = vector.broadcast %221 : vector<1x128xf32> to vector<16x128xf32>
    %223 = arith.addf %219, %222 : vector<16x128xf32>
    %cst_128 = arith.constant 0.000000e+00 : f32
    %224 = vector.broadcast %cst_128 : f32 to vector<16x128xf32>
    %225 = arith.maximumf %223, %224 : vector<16x128xf32>
    %226 = arith.truncf %225 : vector<16x128xf32> to vector<16x128xbf16>
    %c1_129 = arith.constant 1 : index
    %c0_130 = arith.constant 0 : index
    %c0_131 = arith.constant 0 : index
    %227 = vector.load %arg16[%c1_129, %c0_130, %c0_131] : memref<2x128x64xbf16, #tpu.memory_space<vmem>>, vector<1x128x64xbf16>
    %228 = vector.shape_cast %227 : vector<1x128x64xbf16> to vector<128x64xbf16>
    %cst_132 = arith.constant dense<0.000000e+00> : vector<16x64xf32>
    %229 = tpu.matmul %226, %228, %cst_132 {dimension_numbers = #tpu.dot_dimension_numbers<[1], [0], [0], [1], [0, 0, 1, 1], [], []>} : vector<16x128xbf16>, vector<128x64xbf16>, vector<16x64xf32> -> vector<16x64xf32>
    %c1_133 = arith.constant 1 : index
    %c0_134 = arith.constant 0 : index
    %c0_135 = arith.constant 0 : index
    %230 = vector.load %arg17[%c1_133, %c0_134, %c0_135] : memref<2x1x64xf32, #tpu.memory_space<vmem>>, vector<1x1x64xf32>
    %231 = vector.shape_cast %230 : vector<1x1x64xf32> to vector<1x64xf32>
    %232 = vector.broadcast %231 : vector<1x64xf32> to vector<16x64xf32>
    %233 = arith.addf %229, %232 : vector<16x64xf32>
    %234 = arith.addf %215, %233 : vector<16x64xf32>
    %c1_136 = arith.constant 1 : index
    %c0_137 = arith.constant 0 : index
    %c0_138 = arith.constant 0 : index
    %235 = vector.load %arg18[%c1_136, %c0_137, %c0_138] : memref<2x1x64xf32, #tpu.memory_space<vmem>>, vector<1x1x64xf32>
    %236 = vector.shape_cast %235 : vector<1x1x64xf32> to vector<1x64xf32>
    %c1_139 = arith.constant 1 : index
    %c0_140 = arith.constant 0 : index
    %c0_141 = arith.constant 0 : index
    %237 = vector.load %arg19[%c1_139, %c0_140, %c0_141] : memref<2x1x64xf32, #tpu.memory_space<vmem>>, vector<1x1x64xf32>
    %238 = vector.shape_cast %237 : vector<1x1x64xf32> to vector<1x64xf32>
    %cst_142 = arith.constant dense<0.000000e+00> : vector<16xf32>
    %239 = vector.multi_reduction <add>, %234, %cst_142 [1] : vector<16x64xf32> to vector<16xf32>
    %240 = vector.shape_cast %239 : vector<16xf32> to vector<16x1xf32>
    %cst_143 = arith.constant 6.400000e+01 : f32
    %241 = vector.broadcast %cst_143 : f32 to vector<16x1xf32>
    %242 = arith.divf %240, %241 : vector<16x1xf32>
    %243 = arith.mulf %234, %234 : vector<16x64xf32>
    %cst_144 = arith.constant dense<0.000000e+00> : vector<16xf32>
    %244 = vector.multi_reduction <add>, %243, %cst_144 [1] : vector<16x64xf32> to vector<16xf32>
    %245 = vector.shape_cast %244 : vector<16xf32> to vector<16x1xf32>
    %cst_145 = arith.constant 6.400000e+01 : f32
    %246 = vector.broadcast %cst_145 : f32 to vector<16x1xf32>
    %247 = arith.divf %245, %246 : vector<16x1xf32>
    %248 = arith.mulf %242, %242 : vector<16x1xf32>
    %249 = arith.subf %247, %248 : vector<16x1xf32>
    %250 = vector.broadcast %242 : vector<16x1xf32> to vector<16x64xf32>
    %251 = arith.subf %234, %250 : vector<16x64xf32>
    %cst_146 = arith.constant 9.99999974E-6 : f32
    %252 = vector.broadcast %cst_146 : f32 to vector<16x1xf32>
    %253 = arith.addf %249, %252 : vector<16x1xf32>
    %254 = math.rsqrt %253 : vector<16x1xf32>
    %255 = vector.broadcast %254 : vector<16x1xf32> to vector<16x64xf32>
    %256 = arith.mulf %251, %255 : vector<16x64xf32>
    %257 = vector.broadcast %236 : vector<1x64xf32> to vector<16x64xf32>
    %258 = arith.mulf %256, %257 : vector<16x64xf32>
    %259 = vector.broadcast %238 : vector<1x64xf32> to vector<16x64xf32>
    %260 = arith.addf %258, %259 : vector<16x64xf32>
    %c0_147 = arith.constant 0 : index
    %c0_148 = arith.constant 0 : index
    %261 = vector.load %arg20[%c0_147, %c0_148] : memref<1x64xf32, #tpu.memory_space<vmem>>, vector<1x64xf32>
    %c0_149 = arith.constant 0 : index
    %c0_150 = arith.constant 0 : index
    %262 = vector.load %arg21[%c0_149, %c0_150] : memref<1x64xf32, #tpu.memory_space<vmem>>, vector<1x64xf32>
    %cst_151 = arith.constant dense<0.000000e+00> : vector<16xf32>
    %263 = vector.multi_reduction <add>, %260, %cst_151 [1] : vector<16x64xf32> to vector<16xf32>
    %264 = vector.shape_cast %263 : vector<16xf32> to vector<16x1xf32>
    %cst_152 = arith.constant 6.400000e+01 : f32
    %265 = vector.broadcast %cst_152 : f32 to vector<16x1xf32>
    %266 = arith.divf %264, %265 : vector<16x1xf32>
    %267 = arith.mulf %260, %260 : vector<16x64xf32>
    %cst_153 = arith.constant dense<0.000000e+00> : vector<16xf32>
    %268 = vector.multi_reduction <add>, %267, %cst_153 [1] : vector<16x64xf32> to vector<16xf32>
    %269 = vector.shape_cast %268 : vector<16xf32> to vector<16x1xf32>
    %cst_154 = arith.constant 6.400000e+01 : f32
    %270 = vector.broadcast %cst_154 : f32 to vector<16x1xf32>
    %271 = arith.divf %269, %270 : vector<16x1xf32>
    %272 = arith.mulf %266, %266 : vector<16x1xf32>
    %273 = arith.subf %271, %272 : vector<16x1xf32>
    %274 = vector.broadcast %266 : vector<16x1xf32> to vector<16x64xf32>
    %275 = arith.subf %260, %274 : vector<16x64xf32>
    %cst_155 = arith.constant 9.99999974E-6 : f32
    %276 = vector.broadcast %cst_155 : f32 to vector<16x1xf32>
    %277 = arith.addf %273, %276 : vector<16x1xf32>
    %278 = math.rsqrt %277 : vector<16x1xf32>
    %279 = vector.broadcast %278 : vector<16x1xf32> to vector<16x64xf32>
    %280 = arith.mulf %275, %279 : vector<16x64xf32>
    %281 = vector.broadcast %261 : vector<1x64xf32> to vector<16x64xf32>
    %282 = arith.mulf %280, %281 : vector<16x64xf32>
    %283 = vector.broadcast %262 : vector<1x64xf32> to vector<16x64xf32>
    %284 = arith.addf %282, %283 : vector<16x64xf32>
    %cst_156 = arith.constant 0.000000e+00 : f32
    %285 = vector.broadcast %cst_156 : f32 to vector<16x64xf32>
    %286 = arith.maximumf %284, %285 : vector<16x64xf32>
    %287 = vector.shape_cast %286 : vector<16x64xf32> to vector<2x8x64xf32>
    %288 = arith.truncf %287 : vector<2x8x64xf32> to vector<2x8x64xbf16>
    %c0_157 = arith.constant 0 : index
    %c0_158 = arith.constant 0 : index
    %c0_159 = arith.constant 0 : index
    %289 = vector.load %arg22[%c0_157, %c0_158, %c0_159] : memref<2x64x9xbf16, #tpu.memory_space<vmem>>, vector<2x64x9xbf16>
    "tpu.trace_start"() <{level = 10 : i32, message = "tbd,tdc->tbc"}> : () -> ()
    %cst_160 = arith.constant dense<0.000000e+00> : vector<2x8x9xf32>
    %290 = tpu.matmul %288, %289, %cst_160 {dimension_numbers = #tpu.dot_dimension_numbers<[2], [1], [1], [2], [0, 0, 0, 1, 1, 2], [0], [0]>} : vector<2x8x64xbf16>, vector<2x64x9xbf16>, vector<2x8x9xf32> -> vector<2x8x9xf32>
    "tpu.trace_stop"() : () -> ()
    %c0_161 = arith.constant 0 : index
    %c0_162 = arith.constant 0 : index
    %291 = vector.load %arg25[%c0_161, %c0_162] : memref<8x9xf32, #tpu.memory_space<vmem>>, vector<8x9xf32>
    %cst_163 = arith.constant dense<0.000000e+00> : vector<8x9xf32>
    %292 = vector.multi_reduction <add>, %290, %cst_163 [0] : vector<2x8x9xf32> to vector<8x9xf32>
    %293 = arith.addf %291, %292 : vector<8x9xf32>
    %c0_164 = arith.constant 0 : index
    %c0_165 = arith.constant 0 : index
    %294 = vector.load %arg25[%c0_164, %c0_165] : memref<8x9xf32, #tpu.memory_space<vmem>>, vector<8x9xf32>
    tpu.vector_store %arg25[%c0_164, %c0_165], %293 {strides = array<i32>} : memref<8x9xf32, #tpu.memory_space<vmem>>, vector<8x9xf32>,
    %c3_i32 = arith.constant 3 : i32
    %295 = arith.cmpi eq, %arg0, %c3_i32 : i32
    %296 = arith.extui %295 : i1 to i32
    %c0_i32_166 = arith.constant 0 : i32
    %297 = arith.cmpi ne, %296, %c0_i32_166 : i32
    scf.if %297 {
      %c0_167 = arith.constant 0 : index
      %c0_168 = arith.constant 0 : index
      %298 = vector.load %arg25[%c0_167, %c0_168] : memref<8x9xf32, #tpu.memory_space<vmem>>, vector<8x9xf32>
      %c0_169 = arith.constant 0 : index
      %c0_170 = arith.constant 0 : index
      %299 = vector.load %arg23[%c0_169, %c0_170] : memref<1x9xf32, #tpu.memory_space<vmem>>, vector<1x9xf32>
      %300 = vector.broadcast %299 : vector<1x9xf32> to vector<8x9xf32>
      %301 = arith.addf %298, %300 : vector<8x9xf32>
      %cst_171 = arith.constant dense<0xFF800000> : vector<8xf32>
      %302 = vector.multi_reduction <maximumf>, %301, %cst_171 [1] : vector<8x9xf32> to vector<8xf32>
      %303 = vector.shape_cast %302 : vector<8xf32> to vector<8x1xf32>
      %304 = vector.broadcast %303 : vector<8x1xf32> to vector<8x9xf32>
      %305 = arith.subf %301, %304 : vector<8x9xf32>
      %306 = math.exp %305 : vector<8x9xf32>
      %cst_172 = arith.constant dense<0.000000e+00> : vector<8xf32>
      %307 = vector.multi_reduction <add>, %306, %cst_172 [1] : vector<8x9xf32> to vector<8xf32>
      %308 = vector.shape_cast %307 : vector<8xf32> to vector<8x1xf32>
      %309 = math.log %308 : vector<8x1xf32>
      %310 = vector.broadcast %309 : vector<8x1xf32> to vector<8x9xf32>
      %311 = arith.subf %305, %310 : vector<8x9xf32>
      %c0_173 = arith.constant 0 : index
      %c0_174 = arith.constant 0 : index
      %312 = vector.load %arg24[%c0_173, %c0_174] : memref<8x9xf32, #tpu.memory_space<vmem>>, vector<8x9xf32>
      tpu.vector_store %arg24[%c0_173, %c0_174], %311 {strides = array<i32>} : memref<8x9xf32, #tpu.memory_space<vmem>>, vector<8x9xf32>,
    } else {
    }
    return
  }
  func.func @transform_0(%arg0: i32) -> (i32, i32, i32) {
    %c0_i32 = arith.constant 0 : i32
    %c0_i32_0 = arith.constant 0 : i32
    %c0_i32_1 = arith.constant 0 : i32
    return %arg0, %c0_i32, %c0_i32_0 : i32, i32, i32
  }
  func.func @transform_1(%arg0: i32) -> (i32, i32) {
    %c0_i32 = arith.constant 0 : i32
    %c0_i32_0 = arith.constant 0 : i32
    %c0_i32_1 = arith.constant 0 : i32
    return %c0_i32, %c0_i32_0 : i32, i32
  }
  func.func @transform_2(%arg0: i32) -> (i32, i32) {
    %c0_i32 = arith.constant 0 : i32
    %c0_i32_0 = arith.constant 0 : i32
    %c0_i32_1 = arith.constant 0 : i32
    return %c0_i32, %c0_i32_0 : i32, i32
  }
  func.func @transform_3(%arg0: i32) -> (i32, i32, i32) {
    %c0_i32 = arith.constant 0 : i32
    %c0_i32_0 = arith.constant 0 : i32
    %c0_i32_1 = arith.constant 0 : i32
    %c0_i32_2 = arith.constant 0 : i32
    return %c0_i32, %c0_i32_0, %c0_i32_1 : i32, i32, i32
  }
  func.func @transform_4(%arg0: i32) -> (i32, i32, i32) {
    %c0_i32 = arith.constant 0 : i32
    %c0_i32_0 = arith.constant 0 : i32
    %c0_i32_1 = arith.constant 0 : i32
    %c0_i32_2 = arith.constant 0 : i32
    return %c0_i32, %c0_i32_0, %c0_i32_1 : i32, i32, i32
  }
  func.func @transform_5(%arg0: i32) -> (i32, i32, i32) {
    %c0_i32 = arith.constant 0 : i32
    %c0_i32_0 = arith.constant 0 : i32
    %c0_i32_1 = arith.constant 0 : i32
    %c0_i32_2 = arith.constant 0 : i32
    return %c0_i32, %c0_i32_0, %c0_i32_1 : i32, i32, i32
  }
  func.func @transform_6(%arg0: i32) -> (i32, i32, i32) {
    %c0_i32 = arith.constant 0 : i32
    %c0_i32_0 = arith.constant 0 : i32
    %c0_i32_1 = arith.constant 0 : i32
    %c0_i32_2 = arith.constant 0 : i32
    return %c0_i32, %c0_i32_0, %c0_i32_1 : i32, i32, i32
  }
  func.func @transform_7(%arg0: i32) -> (i32, i32, i32) {
    %c0_i32 = arith.constant 0 : i32
    %c0_i32_0 = arith.constant 0 : i32
    %c0_i32_1 = arith.constant 0 : i32
    %c0_i32_2 = arith.constant 0 : i32
    return %c0_i32, %c0_i32_0, %c0_i32_1 : i32, i32, i32
  }
  func.func @transform_8(%arg0: i32) -> (i32, i32, i32) {
    %c0_i32 = arith.constant 0 : i32
    %c0_i32_0 = arith.constant 0 : i32
    %c0_i32_1 = arith.constant 0 : i32
    %c0_i32_2 = arith.constant 0 : i32
    return %c0_i32, %c0_i32_0, %c0_i32_1 : i32, i32, i32
  }
  func.func @transform_9(%arg0: i32) -> (i32, i32, i32) {
    %c0_i32 = arith.constant 0 : i32
    %c0_i32_0 = arith.constant 0 : i32
    %c0_i32_1 = arith.constant 0 : i32
    %c0_i32_2 = arith.constant 0 : i32
    return %c0_i32, %c0_i32_0, %c0_i32_1 : i32, i32, i32
  }
  func.func @transform_10(%arg0: i32) -> (i32, i32, i32) {
    %c0_i32 = arith.constant 0 : i32
    %c0_i32_0 = arith.constant 0 : i32
    %c0_i32_1 = arith.constant 0 : i32
    %c0_i32_2 = arith.constant 0 : i32
    return %c0_i32, %c0_i32_0, %c0_i32_1 : i32, i32, i32
  }
  func.func @transform_11(%arg0: i32) -> (i32, i32, i32) {
    %c0_i32 = arith.constant 0 : i32
    %c0_i32_0 = arith.constant 0 : i32
    %c0_i32_1 = arith.constant 0 : i32
    %c0_i32_2 = arith.constant 0 : i32
    return %c0_i32, %c0_i32_0, %c0_i32_1 : i32, i32, i32
  }
  func.func @transform_12(%arg0: i32) -> (i32, i32, i32) {
    %c0_i32 = arith.constant 0 : i32
    %c0_i32_0 = arith.constant 0 : i32
    %c0_i32_1 = arith.constant 0 : i32
    %c0_i32_2 = arith.constant 0 : i32
    return %c0_i32, %c0_i32_0, %c0_i32_1 : i32, i32, i32
  }
  func.func @transform_13(%arg0: i32) -> (i32, i32, i32) {
    %c0_i32 = arith.constant 0 : i32
    %c0_i32_0 = arith.constant 0 : i32
    %c0_i32_1 = arith.constant 0 : i32
    %c0_i32_2 = arith.constant 0 : i32
    return %c0_i32, %c0_i32_0, %c0_i32_1 : i32, i32, i32
  }
  func.func @transform_14(%arg0: i32) -> (i32, i32, i32) {
    %c0_i32 = arith.constant 0 : i32
    %c0_i32_0 = arith.constant 0 : i32
    %c0_i32_1 = arith.constant 0 : i32
    %c0_i32_2 = arith.constant 0 : i32
    return %c0_i32, %c0_i32_0, %c0_i32_1 : i32, i32, i32
  }
  func.func @transform_15(%arg0: i32) -> (i32, i32, i32) {
    %c0_i32 = arith.constant 0 : i32
    %c0_i32_0 = arith.constant 0 : i32
    %c0_i32_1 = arith.constant 0 : i32
    %c0_i32_2 = arith.constant 0 : i32
    return %c0_i32, %c0_i32_0, %c0_i32_1 : i32, i32, i32
  }
  func.func @transform_16(%arg0: i32) -> (i32, i32, i32) {
    %c0_i32 = arith.constant 0 : i32
    %c0_i32_0 = arith.constant 0 : i32
    %c0_i32_1 = arith.constant 0 : i32
    %c0_i32_2 = arith.constant 0 : i32
    return %c0_i32, %c0_i32_0, %c0_i32_1 : i32, i32, i32
  }
  func.func @transform_17(%arg0: i32) -> (i32, i32, i32) {
    %c0_i32 = arith.constant 0 : i32
    %c0_i32_0 = arith.constant 0 : i32
    %c0_i32_1 = arith.constant 0 : i32
    %c0_i32_2 = arith.constant 0 : i32
    return %c0_i32, %c0_i32_0, %c0_i32_1 : i32, i32, i32
  }
  func.func @transform_18(%arg0: i32) -> (i32, i32, i32) {
    %c0_i32 = arith.constant 0 : i32
    %c0_i32_0 = arith.constant 0 : i32
    %c0_i32_1 = arith.constant 0 : i32
    %c0_i32_2 = arith.constant 0 : i32
    return %c0_i32, %c0_i32_0, %c0_i32_1 : i32, i32, i32
  }
  func.func @transform_19(%arg0: i32) -> (i32, i32) {
    %c0_i32 = arith.constant 0 : i32
    %c0_i32_0 = arith.constant 0 : i32
    %c0_i32_1 = arith.constant 0 : i32
    return %c0_i32, %c0_i32_0 : i32, i32
  }
  func.func @transform_20(%arg0: i32) -> (i32, i32) {
    %c0_i32 = arith.constant 0 : i32
    %c0_i32_0 = arith.constant 0 : i32
    %c0_i32_1 = arith.constant 0 : i32
    return %c0_i32, %c0_i32_0 : i32, i32
  }
  func.func @transform_21(%arg0: i32) -> (i32, i32, i32) {
    %c0_i32 = arith.constant 0 : i32
    %c0_i32_0 = arith.constant 0 : i32
    %c0_i32_1 = arith.constant 0 : i32
    return %arg0, %c0_i32, %c0_i32_0 : i32, i32, i32
  }
  func.func @transform_22(%arg0: i32) -> (i32, i32) {
    %c0_i32 = arith.constant 0 : i32
    %c0_i32_0 = arith.constant 0 : i32
    %c0_i32_1 = arith.constant 0 : i32
    return %c0_i32, %c0_i32_0 : i32, i32
  }
  func.func @transform_23(%arg0: i32) -> (i32, i32) {
    %c0_i32 = arith.constant 0 : i32
    %c0_i32_0 = arith.constant 0 : i32
    %c0_i32_1 = arith.constant 0 : i32
    return %c0_i32, %c0_i32_0 : i32, i32
  }
}

</mosaic_0001>

<llo_original>
// kernel: transformer_forward.1
$region0: #{transformer_forward.1}
  #allocation0 [shape = 'u32[]', space=smem, size = 0x4, offset = 0x4, fixed_abs, tag = 'smem constant byte address 0x4 - core index']
  #allocation1 [shape = 'u32[72,128]{1,0:T(1,128)}', space=vmem, size = 0x9000, scoped, tag = 'internal scratch']
  #allocation2 [shape = 'f32[8,9]{1,0:T(8,128)}', space=vmem, size = 0x1000, scoped, tag = 'scratch operand']
  %s0 = inlined_call_operand.vmem [shape: f32[8,8,13], index: 0, kind: input, shape index: {}]
  %s1 = inlined_call_operand.vmem [shape: bf16[13,64], index: 1, kind: input, shape index: {}]
  %s2 = inlined_call_operand.vmem [shape: f32[1,64], index: 2, kind: input, shape index: {}]
  %s3 = inlined_call_operand.vmem [shape: bf16[2,64,64], index: 3, kind: input, shape index: {}]
  %s4 = inlined_call_operand.vmem [shape: bf16[2,64,64], index: 4, kind: input, shape index: {}]
  %s5 = inlined_call_operand.vmem [shape: bf16[2,64,64], index: 5, kind: input, shape index: {}]
  %s6 = inlined_call_operand.vmem [shape: f32[2,1,64], index: 6, kind: input, shape index: {}]
  %s7 = inlined_call_operand.vmem [shape: f32[2,1,64], index: 7, kind: input, shape index: {}]
  %s8 = inlined_call_operand.vmem [shape: f32[2,1,64], index: 8, kind: input, shape index: {}]
  %s9 = inlined_call_operand.vmem [shape: bf16[2,64,64], index: 9, kind: input, shape index: {}]
  %s10 = inlined_call_operand.vmem [shape: f32[2,1,64], index: 10, kind: input, shape index: {}]
  %s11 = inlined_call_operand.vmem [shape: f32[2,1,64], index: 11, kind: input, shape index: {}]
  %s12 = inlined_call_operand.vmem [shape: f32[2,1,64], index: 12, kind: input, shape index: {}]
  %s13 = inlined_call_operand.vmem [shape: bf16[2,64,128], index: 13, kind: input, shape index: {}]
  %s14 = inlined_call_operand.vmem [shape: f32[2,1,128], index: 14, kind: input, shape index: {}]
  %s15 = inlined_call_operand.vmem [shape: bf16[2,128,64], index: 15, kind: input, shape index: {}]
  %s16 = inlined_call_operand.vmem [shape: f32[2,1,64], index: 16, kind: input, shape index: {}]
  %s17 = inlined_call_operand.vmem [shape: f32[2,1,64], index: 17, kind: input, shape index: {}]
  %s18 = inlined_call_operand.vmem [shape: f32[2,1,64], index: 18, kind: input, shape index: {}]
  %s19 = inlined_call_operand.vmem [shape: f32[1,64], index: 19, kind: input, shape index: {}]
  %s20 = inlined_call_operand.vmem [shape: f32[1,64], index: 20, kind: input, shape index: {}]
  %s21 = inlined_call_operand.vmem [shape: bf16[8,64,9], index: 21, kind: input, shape index: {}]
  %s22 = inlined_call_operand.vmem [shape: f32[1,9], index: 22, kind: input, shape index: {}]
  %s23 = inlined_call_operand.hbm [shape: f32[8,9], index: 23, kind: output, shape index: {}]
  %s24 = sld [smem:[#allocation0]]
  $region133: #{transformer_forward.1} parent=0
    _
  %s26 = ssub.s32 1, %s24
  %s27 = scalar_select 0, %s26, %s24
  $region1: #{transformer_forward.1} parent=0
    #allocation3 [shape = 'u8[4096]{0}', space=vmem, size = 0x1000, scoped, tag = 'output window, operand 0, single buffered']
    #allocation4 [shape = 's32[2]{0}', space=sflag, size = 0x8, scoped, tag = 'scoped memory for transformer_forward.1']
    %28 = vsyncpa [#allocation4], 0
    loop: start=0, step=1, limit=6
    $region2: #{transformer_forward.1} parent=1 // loop_pre_header
      _
    $region3: #{transformer_forward.1} parent=1 // loop_header
      %s30 = sphi 0, %s34
      %p31 = scmp.ge.s32.totalorder %s30, 6
      %s40 = sphi 0, %s42
      %s43 = sphi 0, %s40
      %s44 = sphi 0, %s43
      %s60 = sphi 0, %s44
      %s64 = sphi 0, %s64
      %s66 = sphi 0, %s64
      %s67 = sphi 0, %s66
      %s81 = sphi 0, %s67
      %s85 = sphi 0, %s85
      %s87 = sphi 0, %s85
      %s88 = sphi 0, %s87
      %s102 = sphi 0, %s88
      %s106 = sphi 0, %s106
      %s108 = sphi 0, %s106
      %s109 = sphi 0, %s108
      %s123 = sphi 0, %s109
      %s127 = sphi 0, %s127
      %s129 = sphi 0, %s127
      %s130 = sphi 0, %s129
      %s144 = sphi 0, %s130
      %s148 = sphi 0, %s148
      %s150 = sphi 0, %s148
      %s151 = sphi 0, %s150
      %s165 = sphi 0, %s151
      %s169 = sphi 0, %s169
      %s171 = sphi 0, %s169
      %s172 = sphi 0, %s171
      %s186 = sphi 0, %s172
      %s190 = sphi 0, %s190
      %s192 = sphi 0, %s190
      %s193 = sphi 0, %s192
      %s207 = sphi 0, %s193
      %s211 = sphi 0, %s211
      %s213 = sphi 0, %s211
      %s214 = sphi 0, %s213
      %s228 = sphi 0, %s214
      %s232 = sphi 0, %s232
      %s234 = sphi 0, %s232
      %s235 = sphi 0, %s234
      %s249 = sphi 0, %s235
      %s253 = sphi 0, %s253
      %s255 = sphi 0, %s253
      %s256 = sphi 0, %s255
      %s270 = sphi 0, %s256
      %s274 = sphi 0, %s274
      %s276 = sphi 0, %s274
      %s277 = sphi 0, %s276
      %s291 = sphi 0, %s277
      %s295 = sphi 0, %s295
      %s297 = sphi 0, %s295
      %s298 = sphi 0, %s297
      %s312 = sphi 0, %s298
      %s316 = sphi 0, %s316
      %s318 = sphi 0, %s316
      %s319 = sphi 0, %s318
      %s333 = sphi 0, %s319
      %s337 = sphi 0, %s337
      %s339 = sphi 0, %s337
      %s340 = sphi 0, %s339
      %s354 = sphi 0, %s340
      %s358 = sphi 0, %s358
      %s360 = sphi 0, %s358
      %s361 = sphi 0, %s360
      %s375 = sphi 0, %s361
      %s379 = sphi 0, %s379
      %s381 = sphi 0, %s379
      %s382 = sphi 0, %s381
      %s396 = sphi 0, %s382
      %s400 = sphi 0, %s400
      %s402 = sphi 0, %s400
      %s403 = sphi 0, %s402
      %s417 = sphi 0, %s403
      %s421 = sphi 0, %s421
      %s423 = sphi 0, %s421
      %s424 = sphi 0, %s423
      %s438 = sphi 0, %s424
      %s442 = sphi 0, %s442
      %s444 = sphi 0, %s442
      %s445 = sphi 0, %s444
      %s459 = sphi 0, %s445
      %s463 = sphi 0, %s463
      %s465 = sphi 0, %s463
      %s466 = sphi 0, %s465
      %s480 = sphi 0, %s466
      %s486 = sphi 0, %s488
      %s489 = sphi 0, %s486
      %s490 = sphi 0, %s489
      %s506 = sphi 0, %s490
      %s510 = sphi 0, %s510
      %s512 = sphi 0, %s510
      %s513 = sphi 0, %s512
      %s527 = sphi 0, %s513
      %s531 = sphi 0, %s531
      %s533 = sphi 0, %s531
      %s534 = sphi 0, %s533
      %s548 = sphi 0, %s534
    $region4: #{transformer_forward.1} parent=1 // loop_header_branch
      %33 = sbr.rel (%p31) target = $region8
    $region5: #{transformer_forward.1} parent=1 // loop_body
      %s35 = ssub.s32 %s30, 1
      %s36 = ssub.s32 %s30, 2
      %s37 = sadd.s32 %s30, 1
      %s38 = ssub.s32 %s30, %s37
      %p39 = scmp.eq.s32.totalorder %s38, 0
      %s41 = sadd.s32 %s40, 1
      %s42 = scalar_select %p39, %s40, %s41
      %p45 = pneg %p39
      %p46 = scmp.eq.s32.totalorder %s30, 3
      %p47 = por %p45, %p46
      %p48 = scmp.ne.s32.totalorder %s40, %s43
      %p49 = scmp.eq.s32.totalorder %s30, 0
      %p50 = por %p48, %p49
      %p51 = scmp.ne.s32.totalorder %s40, %s43
      %p52 = scmp.eq.s32.totalorder %s35, 3
      %p53 = por %p51, %p52
      %p54 = scmp.ne.s32.totalorder %s43, %s44
      %p55 = scmp.eq.s32.totalorder %s35, 0
      %p56 = por %p54, %p55
      %p57 = scmp.ne.s32.totalorder %s43, %s44
      %p58 = scmp.eq.s32.totalorder %s36, 3
      %p59 = por %p57, %p58
      %p61 = scmp.ne.s32.totalorder %s44, %s60
      %p62 = scmp.eq.s32.totalorder %s36, 0
      %p63 = por %p61, %p62
      %s65 = sadd.s32 %s64, 1
      %p68 = scmp.eq.s32.totalorder %s30, 3
      %p69 = scmp.ne.s32.totalorder %s64, %s66
      %p70 = scmp.eq.s32.totalorder %s30, 0
      %p71 = por %p69, %p70
      %p72 = scmp.ne.s32.totalorder %s64, %s66
      %p73 = scmp.eq.s32.totalorder %s35, 3
      %p74 = por %p72, %p73
      %p75 = scmp.ne.s32.totalorder %s66, %s67
      %p76 = scmp.eq.s32.totalorder %s35, 0
      %p77 = por %p75, %p76
      %p78 = scmp.ne.s32.totalorder %s66, %s67
      %p79 = scmp.eq.s32.totalorder %s36, 3
      %p80 = por %p78, %p79
      %p82 = scmp.ne.s32.totalorder %s67, %s81
      %p83 = scmp.eq.s32.totalorder %s36, 0
      %p84 = por %p82, %p83
      %s86 = sadd.s32 %s85, 1
      %p89 = scmp.eq.s32.totalorder %s30, 3
      %p90 = scmp.ne.s32.totalorder %s85, %s87
      %p91 = scmp.eq.s32.totalorder %s30, 0
      %p92 = por %p90, %p91
      %p93 = scmp.ne.s32.totalorder %s85, %s87
      %p94 = scmp.eq.s32.totalorder %s35, 3
      %p95 = por %p93, %p94
      %p96 = scmp.ne.s32.totalorder %s87, %s88
      %p97 = scmp.eq.s32.totalorder %s35, 0
      %p98 = por %p96, %p97
      %p99 = scmp.ne.s32.totalorder %s87, %s88
      %p100 = scmp.eq.s32.totalorder %s36, 3
      %p101 = por %p99, %p100
      %p103 = scmp.ne.s32.totalorder %s88, %s102
      %p104 = scmp.eq.s32.totalorder %s36, 0
      %p105 = por %p103, %p104
      %s107 = sadd.s32 %s106, 1
      %p110 = scmp.eq.s32.totalorder %s30, 3
      %p111 = scmp.ne.s32.totalorder %s106, %s108
      %p112 = scmp.eq.s32.totalorder %s30, 0
      %p113 = por %p111, %p112
      %p114 = scmp.ne.s32.totalorder %s106, %s108
      %p115 = scmp.eq.s32.totalorder %s35, 3
      %p116 = por %p114, %p115
      %p117 = scmp.ne.s32.totalorder %s108, %s109
      %p118 = scmp.eq.s32.totalorder %s35, 0
      %p119 = por %p117, %p118
      %p120 = scmp.ne.s32.totalorder %s108, %s109
      %p121 = scmp.eq.s32.totalorder %s36, 3
      %p122 = por %p120, %p121
      %p124 = scmp.ne.s32.totalorder %s109, %s123
      %p125 = scmp.eq.s32.totalorder %s36, 0
      %p126 = por %p124, %p125
      %s128 = sadd.s32 %s127, 1
      %p131 = scmp.eq.s32.totalorder %s30, 3
      %p132 = scmp.ne.s32.totalorder %s127, %s129
      %p133 = scmp.eq.s32.totalorder %s30, 0
      %p134 = por %p132, %p133
      %p135 = scmp.ne.s32.totalorder %s127, %s129
      %p136 = scmp.eq.s32.totalorder %s35, 3
      %p137 = por %p135, %p136
      %p138 = scmp.ne.s32.totalorder %s129, %s130
      %p139 = scmp.eq.s32.totalorder %s35, 0
      %p140 = por %p138, %p139
      %p141 = scmp.ne.s32.totalorder %s129, %s130
      %p142 = scmp.eq.s32.totalorder %s36, 3
      %p143 = por %p141, %p142
      %p145 = scmp.ne.s32.totalorder %s130, %s144
      %p146 = scmp.eq.s32.totalorder %s36, 0
      %p147 = por %p145, %p146
      %s149 = sadd.s32 %s148, 1
      %p152 = scmp.eq.s32.totalorder %s30, 3
      %p153 = scmp.ne.s32.totalorder %s148, %s150
      %p154 = scmp.eq.s32.totalorder %s30, 0
      %p155 = por %p153, %p154
      %p156 = scmp.ne.s32.totalorder %s148, %s150
      %p157 = scmp.eq.s32.totalorder %s35, 3
      %p158 = por %p156, %p157
      %p159 = scmp.ne.s32.totalorder %s150, %s151
      %p160 = scmp.eq.s32.totalorder %s35, 0
      %p161 = por %p159, %p160
      %p162 = scmp.ne.s32.totalorder %s150, %s151
      %p163 = scmp.eq.s32.totalorder %s36, 3
      %p164 = por %p162, %p163
      %p166 = scmp.ne.s32.totalorder %s151, %s165
      %p167 = scmp.eq.s32.totalorder %s36, 0
      %p168 = por %p166, %p167
      %s170 = sadd.s32 %s169, 1
      %p173 = scmp.eq.s32.totalorder %s30, 3
      %p174 = scmp.ne.s32.totalorder %s169, %s171
      %p175 = scmp.eq.s32.totalorder %s30, 0
      %p176 = por %p174, %p175
      %p177 = scmp.ne.s32.totalorder %s169, %s171
      %p178 = scmp.eq.s32.totalorder %s35, 3
      %p179 = por %p177, %p178
      %p180 = scmp.ne.s32.totalorder %s171, %s172
      %p181 = scmp.eq.s32.totalorder %s35, 0
      %p182 = por %p180, %p181
      %p183 = scmp.ne.s32.totalorder %s171, %s172
      %p184 = scmp.eq.s32.totalorder %s36, 3
      %p185 = por %p183, %p184
      %p187 = scmp.ne.s32.totalorder %s172, %s186
      %p188 = scmp.eq.s32.totalorder %s36, 0
      %p189 = por %p187, %p188
      %s191 = sadd.s32 %s190, 1
      %p194 = scmp.eq.s32.totalorder %s30, 3
      %p195 = scmp.ne.s32.totalorder %s190, %s192
      %p196 = scmp.eq.s32.totalorder %s30, 0
      %p197 = por %p195, %p196
      %p198 = scmp.ne.s32.totalorder %s190, %s192
      %p199 = scmp.eq.s32.totalorder %s35, 3
      %p200 = por %p198, %p199
      %p201 = scmp.ne.s32.totalorder %s192, %s193
      %p202 = scmp.eq.s32.totalorder %s35, 0
      %p203 = por %p201, %p202
      %p204 = scmp.ne.s32.totalorder %s192, %s193
      %p205 = scmp.eq.s32.totalorder %s36, 3
      %p206 = por %p204, %p205
      %p208 = scmp.ne.s32.totalorder %s193, %s207
      %p209 = scmp.eq.s32.totalorder %s36, 0
      %p210 = por %p208, %p209
      %s212 = sadd.s32 %s211, 1
      %p215 = scmp.eq.s32.totalorder %s30, 3
      %p216 = scmp.ne.s32.totalorder %s211, %s213
      %p217 = scmp.eq.s32.totalorder %s30, 0
      %p218 = por %p216, %p217
      %p219 = scmp.ne.s32.totalorder %s211, %s213
      %p220 = scmp.eq.s32.totalorder %s35, 3
      %p221 = por %p219, %p220
      %p222 = scmp.ne.s32.totalorder %s213, %s214
      %p223 = scmp.eq.s32.totalorder %s35, 0
      %p224 = por %p222, %p223
      %p225 = scmp.ne.s32.totalorder %s213, %s214
      %p226 = scmp.eq.s32.totalorder %s36, 3
      %p227 = por %p225, %p226
      %p229 = scmp.ne.s32.totalorder %s214, %s228
      %p230 = scmp.eq.s32.totalorder %s36, 0
      %p231 = por %p229, %p230
      %s233 = sadd.s32 %s232, 1
      %p236 = scmp.eq.s32.totalorder %s30, 3
      %p237 = scmp.ne.s32.totalorder %s232, %s234
      %p238 = scmp.eq.s32.totalorder %s30, 0
      %p239 = por %p237, %p238
      %p240 = scmp.ne.s32.totalorder %s232, %s234
      %p241 = scmp.eq.s32.totalorder %s35, 3
      %p242 = por %p240, %p241
      %p243 = scmp.ne.s32.totalorder %s234, %s235
      %p244 = scmp.eq.s32.totalorder %s35, 0
      %p245 = por %p243, %p244
      %p246 = scmp.ne.s32.totalorder %s234, %s235
      %p247 = scmp.eq.s32.totalorder %s36, 3
      %p248 = por %p246, %p247
      %p250 = scmp.ne.s32.totalorder %s235, %s249
      %p251 = scmp.eq.s32.totalorder %s36, 0
      %p252 = por %p250, %p251
      %s254 = sadd.s32 %s253, 1
      %p257 = scmp.eq.s32.totalorder %s30, 3
      %p258 = scmp.ne.s32.totalorder %s253, %s255
      %p259 = scmp.eq.s32.totalorder %s30, 0
      %p260 = por %p258, %p259
      %p261 = scmp.ne.s32.totalorder %s253, %s255
      %p262 = scmp.eq.s32.totalorder %s35, 3
      %p263 = por %p261, %p262
      %p264 = scmp.ne.s32.totalorder %s255, %s256
      %p265 = scmp.eq.s32.totalorder %s35, 0
      %p266 = por %p264, %p265
      %p267 = scmp.ne.s32.totalorder %s255, %s256
      %p268 = scmp.eq.s32.totalorder %s36, 3
      %p269 = por %p267, %p268
      %p271 = scmp.ne.s32.totalorder %s256, %s270
      %p272 = scmp.eq.s32.totalorder %s36, 0
      %p273 = por %p271, %p272
      %s275 = sadd.s32 %s274, 1
      %p278 = scmp.eq.s32.totalorder %s30, 3
      %p279 = scmp.ne.s32.totalorder %s274, %s276
      %p280 = scmp.eq.s32.totalorder %s30, 0
      %p281 = por %p279, %p280
      %p282 = scmp.ne.s32.totalorder %s274, %s276
      %p283 = scmp.eq.s32.totalorder %s35, 3
      %p284 = por %p282, %p283
      %p285 = scmp.ne.s32.totalorder %s276, %s277
      %p286 = scmp.eq.s32.totalorder %s35, 0
      %p287 = por %p285, %p286
      %p288 = scmp.ne.s32.totalorder %s276, %s277
      %p289 = scmp.eq.s32.totalorder %s36, 3
      %p290 = por %p288, %p289
      %p292 = scmp.ne.s32.totalorder %s277, %s291
      %p293 = scmp.eq.s32.totalorder %s36, 0
      %p294 = por %p292, %p293
      %s296 = sadd.s32 %s295, 1
      %p299 = scmp.eq.s32.totalorder %s30, 3
      %p300 = scmp.ne.s32.totalorder %s295, %s297
      %p301 = scmp.eq.s32.totalorder %s30, 0
      %p302 = por %p300, %p301
      %p303 = scmp.ne.s32.totalorder %s295, %s297
      %p304 = scmp.eq.s32.totalorder %s35, 3
      %p305 = por %p303, %p304
      %p306 = scmp.ne.s32.totalorder %s297, %s298
      %p307 = scmp.eq.s32.totalorder %s35, 0
      %p308 = por %p306, %p307
      %p309 = scmp.ne.s32.totalorder %s297, %s298
      %p310 = scmp.eq.s32.totalorder %s36, 3
      %p311 = por %p309, %p310
      %p313 = scmp.ne.s32.totalorder %s298, %s312
      %p314 = scmp.eq.s32.totalorder %s36, 0
      %p315 = por %p313, %p314
      %s317 = sadd.s32 %s316, 1
      %p320 = scmp.eq.s32.totalorder %s30, 3
      %p321 = scmp.ne.s32.totalorder %s316, %s318
      %p322 = scmp.eq.s32.totalorder %s30, 0
      %p323 = por %p321, %p322
      %p324 = scmp.ne.s32.totalorder %s316, %s318
      %p325 = scmp.eq.s32.totalorder %s35, 3
      %p326 = por %p324, %p325
      %p327 = scmp.ne.s32.totalorder %s318, %s319
      %p328 = scmp.eq.s32.totalorder %s35, 0
      %p329 = por %p327, %p328
      %p330 = scmp.ne.s32.totalorder %s318, %s319
      %p331 = scmp.eq.s32.totalorder %s36, 3
      %p332 = por %p330, %p331
      %p334 = scmp.ne.s32.totalorder %s319, %s333
      %p335 = scmp.eq.s32.totalorder %s36, 0
      %p336 = por %p334, %p335
      %s338 = sadd.s32 %s337, 1
      %p341 = scmp.eq.s32.totalorder %s30, 3
      %p342 = scmp.ne.s32.totalorder %s337, %s339
      %p343 = scmp.eq.s32.totalorder %s30, 0
      %p344 = por %p342, %p343
      %p345 = scmp.ne.s32.totalorder %s337, %s339
      %p346 = scmp.eq.s32.totalorder %s35, 3
      %p347 = por %p345, %p346
      %p348 = scmp.ne.s32.totalorder %s339, %s340
      %p349 = scmp.eq.s32.totalorder %s35, 0
      %p350 = por %p348, %p349
      %p351 = scmp.ne.s32.totalorder %s339, %s340
      %p352 = scmp.eq.s32.totalorder %s36, 3
      %p353 = por %p351, %p352
      %p355 = scmp.ne.s32.totalorder %s340, %s354
      %p356 = scmp.eq.s32.totalorder %s36, 0
      %p357 = por %p355, %p356
      %s359 = sadd.s32 %s358, 1
      %p362 = scmp.eq.s32.totalorder %s30, 3
      %p363 = scmp.ne.s32.totalorder %s358, %s360
      %p364 = scmp.eq.s32.totalorder %s30, 0
      %p365 = por %p363, %p364
      %p366 = scmp.ne.s32.totalorder %s358, %s360
      %p367 = scmp.eq.s32.totalorder %s35, 3
      %p368 = por %p366, %p367
      %p369 = scmp.ne.s32.totalorder %s360, %s361
      %p370 = scmp.eq.s32.totalorder %s35, 0
      %p371 = por %p369, %p370
      %p372 = scmp.ne.s32.totalorder %s360, %s361
      %p373 = scmp.eq.s32.totalorder %s36, 3
      %p374 = por %p372, %p373
      %p376 = scmp.ne.s32.totalorder %s361, %s375
      %p377 = scmp.eq.s32.totalorder %s36, 0
      %p378 = por %p376, %p377
      %s380 = sadd.s32 %s379, 1
      %p383 = scmp.eq.s32.totalorder %s30, 3
      %p384 = scmp.ne.s32.totalorder %s379, %s381
      %p385 = scmp.eq.s32.totalorder %s30, 0
      %p386 = por %p384, %p385
      %p387 = scmp.ne.s32.totalorder %s379, %s381
      %p388 = scmp.eq.s32.totalorder %s35, 3
      %p389 = por %p387, %p388
      %p390 = scmp.ne.s32.totalorder %s381, %s382
      %p391 = scmp.eq.s32.totalorder %s35, 0
      %p392 = por %p390, %p391
      %p393 = scmp.ne.s32.totalorder %s381, %s382
      %p394 = scmp.eq.s32.totalorder %s36, 3
      %p395 = por %p393, %p394
      %p397 = scmp.ne.s32.totalorder %s382, %s396
      %p398 = scmp.eq.s32.totalorder %s36, 0
      %p399 = por %p397, %p398
      %s401 = sadd.s32 %s400, 1
      %p404 = scmp.eq.s32.totalorder %s30, 3
      %p405 = scmp.ne.s32.totalorder %s400, %s402
      %p406 = scmp.eq.s32.totalorder %s30, 0
      %p407 = por %p405, %p406
      %p408 = scmp.ne.s32.totalorder %s400, %s402
      %p409 = scmp.eq.s32.totalorder %s35, 3
      %p410 = por %p408, %p409
      %p411 = scmp.ne.s32.totalorder %s402, %s403
      %p412 = scmp.eq.s32.totalorder %s35, 0
      %p413 = por %p411, %p412
      %p414 = scmp.ne.s32.totalorder %s402, %s403
      %p415 = scmp.eq.s32.totalorder %s36, 3
      %p416 = por %p414, %p415
      %p418 = scmp.ne.s32.totalorder %s403, %s417
      %p419 = scmp.eq.s32.totalorder %s36, 0
      %p420 = por %p418, %p419
      %s422 = sadd.s32 %s421, 1
      %p425 = scmp.eq.s32.totalorder %s30, 3
      %p426 = scmp.ne.s32.totalorder %s421, %s423
      %p427 = scmp.eq.s32.totalorder %s30, 0
      %p428 = por %p426, %p427
      %p429 = scmp.ne.s32.totalorder %s421, %s423
      %p430 = scmp.eq.s32.totalorder %s35, 3
      %p431 = por %p429, %p430
      %p432 = scmp.ne.s32.totalorder %s423, %s424
      %p433 = scmp.eq.s32.totalorder %s35, 0
      %p434 = por %p432, %p433
      %p435 = scmp.ne.s32.totalorder %s423, %s424
      %p436 = scmp.eq.s32.totalorder %s36, 3
      %p437 = por %p435, %p436
      %p439 = scmp.ne.s32.totalorder %s424, %s438
      %p440 = scmp.eq.s32.totalorder %s36, 0
      %p441 = por %p439, %p440
      %s443 = sadd.s32 %s442, 1
      %p446 = scmp.eq.s32.totalorder %s30, 3
      %p447 = scmp.ne.s32.totalorder %s442, %s444
      %p448 = scmp.eq.s32.totalorder %s30, 0
      %p449 = por %p447, %p448
      %p450 = scmp.ne.s32.totalorder %s442, %s444
      %p451 = scmp.eq.s32.totalorder %s35, 3
      %p452 = por %p450, %p451
      %p453 = scmp.ne.s32.totalorder %s444, %s445
      %p454 = scmp.eq.s32.totalorder %s35, 0
      %p455 = por %p453, %p454
      %p456 = scmp.ne.s32.totalorder %s444, %s445
      %p457 = scmp.eq.s32.totalorder %s36, 3
      %p458 = por %p456, %p457
      %p460 = scmp.ne.s32.totalorder %s445, %s459
      %p461 = scmp.eq.s32.totalorder %s36, 0
      %p462 = por %p460, %p461
      %s464 = sadd.s32 %s463, 1
      %p467 = scmp.eq.s32.totalorder %s30, 3
      %p468 = scmp.ne.s32.totalorder %s463, %s465
      %p469 = scmp.eq.s32.totalorder %s30, 0
      %p470 = por %p468, %p469
      %p471 = scmp.ne.s32.totalorder %s463, %s465
      %p472 = scmp.eq.s32.totalorder %s35, 3
      %p473 = por %p471, %p472
      %p474 = scmp.ne.s32.totalorder %s465, %s466
      %p475 = scmp.eq.s32.totalorder %s35, 0
      %p476 = por %p474, %p475
      %p477 = scmp.ne.s32.totalorder %s465, %s466
      %p478 = scmp.eq.s32.totalorder %s36, 3
      %p479 = por %p477, %p478
      %p481 = scmp.ne.s32.totalorder %s466, %s480
      %p482 = scmp.eq.s32.totalorder %s36, 0
      %p483 = por %p481, %p482
      %s484 = ssub.s32 %s30, %s37
      %p485 = scmp.eq.s32.totalorder %s484, 0
      %s487 = sadd.s32 %s486, 1
      %s488 = scalar_select %p485, %s486, %s487
      %p491 = pneg %p485
      %p492 = scmp.eq.s32.totalorder %s30, 3
      %p493 = por %p491, %p492
      %p494 = scmp.ne.s32.totalorder %s486, %s489
      %p495 = scmp.eq.s32.totalorder %s30, 0
      %p496 = por %p494, %p495
      %p497 = scmp.ne.s32.totalorder %s486, %s489
      %p498 = scmp.eq.s32.totalorder %s35, 3
      %p499 = por %p497, %p498
      %p500 = scmp.ne.s32.totalorder %s489, %s490
      %p501 = scmp.eq.s32.totalorder %s35, 0
      %p502 = por %p500, %p501
      %p503 = scmp.ne.s32.totalorder %s489, %s490
      %p504 = scmp.eq.s32.totalorder %s36, 3
      %p505 = por %p503, %p504
      %p507 = scmp.ne.s32.totalorder %s490, %s506
      %p508 = scmp.eq.s32.totalorder %s36, 0
      %p509 = por %p507, %p508
      %s511 = sadd.s32 %s510, 1
      %p514 = scmp.eq.s32.totalorder %s30, 3
      %p515 = scmp.ne.s32.totalorder %s510, %s512
      %p516 = scmp.eq.s32.totalorder %s30, 0
      %p517 = por %p515, %p516
      %p518 = scmp.ne.s32.totalorder %s510, %s512
      %p519 = scmp.eq.s32.totalorder %s35, 3
      %p520 = por %p518, %p519
      %p521 = scmp.ne.s32.totalorder %s512, %s513
      %p522 = scmp.eq.s32.totalorder %s35, 0
      %p523 = por %p521, %p522
      %p524 = scmp.ne.s32.totalorder %s512, %s513
      %p525 = scmp.eq.s32.totalorder %s36, 3
      %p526 = por %p524, %p525
      %p528 = scmp.ne.s32.totalorder %s513, %s527
      %p529 = scmp.eq.s32.totalorder %s36, 0
      %p530 = por %p528, %p529
      %s532 = sadd.s32 %s531, 1
      %p535 = scmp.eq.s32.totalorder %s30, 3
      %p536 = scmp.ne.s32.totalorder %s531, %s533
      %p537 = scmp.eq.s32.totalorder %s30, 0
      %p538 = por %p536, %p537
      %p539 = scmp.ne.s32.totalorder %s531, %s533
      %p540 = scmp.eq.s32.totalorder %s35, 3
      %p541 = por %p539, %p540
      %p542 = scmp.ne.s32.totalorder %s533, %s534
      %p543 = scmp.eq.s32.totalorder %s35, 0
      %p544 = por %p542, %p543
      %p545 = scmp.ne.s32.totalorder %s533, %s534
      %p546 = scmp.eq.s32.totalorder %s36, 3
      %p547 = por %p545, %p546
      %p549 = scmp.ne.s32.totalorder %s534, %s548
      %p550 = scmp.eq.s32.totalorder %s36, 0
      %p551 = por %p549, %p550
      %p552 = scmp.le.s32.totalorder 1, %s30
      %p553 = scmp.lt.s32.totalorder %s30, 5
      %p554 = pnand %p552, %p553
      %p555 = pneg %p554
      // Predicated region
      $region9: #{transformer_forward.1} parent=5 // pred_check
        _
      $region10: #{transformer_forward.1} parent=5 // pred_check_branch
        %557 = sbr.rel (%p554) target = $region12
      $region11: #{transformer_forward.1} parent=5 // pred_region
        %s558 = ssub.s32 %s30, 1
        // Predicated region
        $region13: #{transformer_forward.1} parent=11 // pred_check
          %p559 = pneg %p77
        $region14: #{transformer_forward.1} parent=11 // pred_check_branch
          %561 = sbr.rel (%p559) target = $region16
        $region15: #{transformer_forward.1} parent=11 // pred_region
          _
        $region16: #{transformer_forward.1} parent=11 // pred_fallthru
          _
        // Predicated region
        $region17: #{transformer_forward.1} parent=11 // pred_check
          %p562 = pneg %p98
        $region18: #{transformer_forward.1} parent=11 // pred_check_branch
          %564 = sbr.rel (%p562) target = $region20
        $region19: #{transformer_forward.1} parent=11 // pred_region
          _
        $region20: #{transformer_forward.1} parent=11 // pred_fallthru
          _
        // Predicated region
        $region21: #{transformer_forward.1} parent=11 // pred_check
          %p565 = pneg %p119
        $region22: #{transformer_forward.1} parent=11 // pred_check_branch
          %567 = sbr.rel (%p565) target = $region24
        $region23: #{transformer_forward.1} parent=11 // pred_region
          _
        $region24: #{transformer_forward.1} parent=11 // pred_fallthru
          _
        // Predicated region
        $region25: #{transformer_forward.1} parent=11 // pred_check
          %p568 = pneg %p140
        $region26: #{transformer_forward.1} parent=11 // pred_check_branch
          %570 = sbr.rel (%p568) target = $region28
        $region27: #{transformer_forward.1} parent=11 // pred_region
          _
        $region28: #{transformer_forward.1} parent=11 // pred_fallthru
          _
        // Predicated region
        $region29: #{transformer_forward.1} parent=11 // pred_check
          %p571 = pneg %p161
        $region30: #{transformer_forward.1} parent=11 // pred_check_branch
          %573 = sbr.rel (%p571) target = $region32
        $region31: #{transformer_forward.1} parent=11 // pred_region
          _
        $region32: #{transformer_forward.1} parent=11 // pred_fallthru
          _
        // Predicated region
        $region33: #{transformer_forward.1} parent=11 // pred_check
          %p574 = pneg %p182
        $region34: #{transformer_forward.1} parent=11 // pred_check_branch
          %576 = sbr.rel (%p574) target = $region36
        $region35: #{transformer_forward.1} parent=11 // pred_region
          _
        $region36: #{transformer_forward.1} parent=11 // pred_fallthru
          _
        // Predicated region
        $region37: #{transformer_forward.1} parent=11 // pred_check
          %p577 = pneg %p203
        $region38: #{transformer_forward.1} parent=11 // pred_check_branch
          %579 = sbr.rel (%p577) target = $region40
        $region39: #{transformer_forward.1} parent=11 // pred_region
          _
        $region40: #{transformer_forward.1} parent=11 // pred_fallthru
          _
        // Predicated region
        $region41: #{transformer_forward.1} parent=11 // pred_check
          %p580 = pneg %p224
        $region42: #{transformer_forward.1} parent=11 // pred_check_branch
          %582 = sbr.rel (%p580) target = $region44
        $region43: #{transformer_forward.1} parent=11 // pred_region
          _
        $region44: #{transformer_forward.1} parent=11 // pred_fallthru
          _
        // Predicated region
        $region45: #{transformer_forward.1} parent=11 // pred_check
          %p583 = pneg %p245
        $region46: #{transformer_forward.1} parent=11 // pred_check_branch
          %585 = sbr.rel (%p583) target = $region48
        $region47: #{transformer_forward.1} parent=11 // pred_region
          _
        $region48: #{transformer_forward.1} parent=11 // pred_fallthru
          _
        // Predicated region
        $region49: #{transformer_forward.1} parent=11 // pred_check
          %p586 = pneg %p266
        $region50: #{transformer_forward.1} parent=11 // pred_check_branch
          %588 = sbr.rel (%p586) target = $region52
        $region51: #{transformer_forward.1} parent=11 // pred_region
          _
        $region52: #{transformer_forward.1} parent=11 // pred_fallthru
          _
        // Predicated region
        $region53: #{transformer_forward.1} parent=11 // pred_check
          %p589 = pneg %p287
        $region54: #{transformer_forward.1} parent=11 // pred_check_branch
          %591 = sbr.rel (%p589) target = $region56
        $region55: #{transformer_forward.1} parent=11 // pred_region
          _
        $region56: #{transformer_forward.1} parent=11 // pred_fallthru
          _
        // Predicated region
        $region57: #{transformer_forward.1} parent=11 // pred_check
          %p592 = pneg %p308
        $region58: #{transformer_forward.1} parent=11 // pred_check_branch
          %594 = sbr.rel (%p592) target = $region60
        $region59: #{transformer_forward.1} parent=11 // pred_region
          _
        $region60: #{transformer_forward.1} parent=11 // pred_fallthru
          _
        // Predicated region
        $region61: #{transformer_forward.1} parent=11 // pred_check
          %p595 = pneg %p329
        $region62: #{transformer_forward.1} parent=11 // pred_check_branch
          %597 = sbr.rel (%p595) target = $region64
        $region63: #{transformer_forward.1} parent=11 // pred_region
          _
        $region64: #{transformer_forward.1} parent=11 // pred_fallthru
          _
        // Predicated region
        $region65: #{transformer_forward.1} parent=11 // pred_check
          %p598 = pneg %p350
        $region66: #{transformer_forward.1} parent=11 // pred_check_branch
          %600 = sbr.rel (%p598) target = $region68
        $region67: #{transformer_forward.1} parent=11 // pred_region
          _
        $region68: #{transformer_forward.1} parent=11 // pred_fallthru
          _
        // Predicated region
        $region69: #{transformer_forward.1} parent=11 // pred_check
          %p601 = pneg %p371
        $region70: #{transformer_forward.1} parent=11 // pred_check_branch
          %603 = sbr.rel (%p601) target = $region72
        $region71: #{transformer_forward.1} parent=11 // pred_region
          _
        $region72: #{transformer_forward.1} parent=11 // pred_fallthru
          _
        // Predicated region
        $region73: #{transformer_forward.1} parent=11 // pred_check
          %p604 = pneg %p392
        $region74: #{transformer_forward.1} parent=11 // pred_check_branch
          %606 = sbr.rel (%p604) target = $region76
        $region75: #{transformer_forward.1} parent=11 // pred_region
          _
        $region76: #{transformer_forward.1} parent=11 // pred_fallthru
          _
        // Predicated region
        $region77: #{transformer_forward.1} parent=11 // pred_check
          %p607 = pneg %p413
        $region78: #{transformer_forward.1} parent=11 // pred_check_branch
          %609 = sbr.rel (%p607) target = $region80
        $region79: #{transformer_forward.1} parent=11 // pred_region
          _
        $region80: #{transformer_forward.1} parent=11 // pred_fallthru
          _
        // Predicated region
        $region81: #{transformer_forward.1} parent=11 // pred_check
          %p610 = pneg %p434
        $region82: #{transformer_forward.1} parent=11 // pred_check_branch
          %612 = sbr.rel (%p610) target = $region84
        $region83: #{transformer_forward.1} parent=11 // pred_region
          _
        $region84: #{transformer_forward.1} parent=11 // pred_fallthru
          _
        // Predicated region
        $region85: #{transformer_forward.1} parent=11 // pred_check
          %p613 = pneg %p455
        $region86: #{transformer_forward.1} parent=11 // pred_check_branch
          %615 = sbr.rel (%p613) target = $region88
        $region87: #{transformer_forward.1} parent=11 // pred_region
          _
        $region88: #{transformer_forward.1} parent=11 // pred_fallthru
          _
        // Predicated region
        $region89: #{transformer_forward.1} parent=11 // pred_check
          %p616 = pneg %p476
        $region90: #{transformer_forward.1} parent=11 // pred_check_branch
          %618 = sbr.rel (%p616) target = $region92
        $region91: #{transformer_forward.1} parent=11 // pred_region
          _
        $region92: #{transformer_forward.1} parent=11 // pred_fallthru
          _
        // Predicated region
        $region93: #{transformer_forward.1} parent=11 // pred_check
          %p619 = pneg %p523
        $region94: #{transformer_forward.1} parent=11 // pred_check_branch
          %621 = sbr.rel (%p619) target = $region96
        $region95: #{transformer_forward.1} parent=11 // pred_region
          _
        $region96: #{transformer_forward.1} parent=11 // pred_fallthru
          _
      $region12: #{transformer_forward.1} parent=5 // pred_fallthru
        _
      %p622 = scmp.lt.s32.totalorder %s30, 4
      // Predicated region
      $region97: #{transformer_forward.1} parent=5 // pred_check
        %p623 = pneg %p622
      $region98: #{transformer_forward.1} parent=5 // pred_check_branch
        %625 = sbr.rel (%p623) target = $region100
      $region99: #{transformer_forward.1} parent=5 // pred_region
        // Predicated region
        $region101: #{transformer_forward.1} parent=99 // pred_check
          %p626 = pneg %p50
        $region102: #{transformer_forward.1} parent=99 // pred_check_branch
          %628 = sbr.rel (%p626) target = $region104
        $region103: #{transformer_forward.1} parent=99 // pred_region
          %s629 = smul.u32 2, %s30
          %p630 = scmp.lt.s32.totalorder %s629, 7
          %s631 = scalar_select %p630, %s629, 7
          %s632 = smul.addr %s631, 8
          %s633 = scalar_lea.vmem %s0, %s632
          %s634 = smul.u32 2, %s30
        $region104: #{transformer_forward.1} parent=99 // pred_fallthru
          _
        // Predicated region
        $region105: #{transformer_forward.1} parent=99 // pred_check
          %p635 = pneg %p496
        $region106: #{transformer_forward.1} parent=99 // pred_check_branch
          %637 = sbr.rel (%p635) target = $region108
        $region107: #{transformer_forward.1} parent=99 // pred_region
          %s638 = smul.u32 2, %s30
          %p639 = scmp.lt.s32.totalorder %s638, 7
          %s640 = scalar_select %p639, %s638, 7
          %s641 = smul.addr %s640, 8
          %s642 = smul.addr %s641, 4
          %s643 = scalar_lea.vmem %s21, %s642
          %s644 = smul.u32 2, %s30
        $region108: #{transformer_forward.1} parent=99 // pred_fallthru
          _
      $region100: #{transformer_forward.1} parent=5 // pred_fallthru
        _
      %p645 = scmp.le.s32.totalorder 1, %s30
      %p646 = scmp.lt.s32.totalorder %s30, 5
      %p647 = pnand %p645, %p646
      %p648 = pneg %p647
      // Predicated region
      $region109: #{transformer_forward.1} parent=5 // pred_check
        _
      $region110: #{transformer_forward.1} parent=5 // pred_check_branch
        %650 = sbr.rel (%p647) target = $region112
      $region111: #{transformer_forward.1} parent=5 // pred_region
        %s651 = ssub.s32 %s30, 1
        %s652 = smul.u32 2, %s35
        %p653 = scmp.lt.s32.totalorder %s652, 7
        %s654 = scalar_select %p653, %s652, 7
        %s655 = smul.addr %s654, 8
        %s656 = scalar_lea.vmem %s0, %s655
        %p657 = pneg %p56
        %p658 = pneg %p53
        %p659 = pneg %p77
        %p660 = pneg %p74
        %p661 = pneg %p98
        %p662 = pneg %p95
        %p663 = pneg %p119
        %p664 = pneg %p116
        %p665 = pneg %p140
        %p666 = pneg %p137
        %p667 = pneg %p161
        %p668 = pneg %p158
        %p669 = pneg %p182
        %p670 = pneg %p179
        %p671 = pneg %p203
        %p672 = pneg %p200
        %p673 = pneg %p224
        %p674 = pneg %p221
        %p675 = pneg %p245
        %p676 = pneg %p242
        %p677 = pneg %p266
        %p678 = pneg %p263
        %p679 = pneg %p287
        %p680 = pneg %p284
        %p681 = pneg %p308
        %p682 = pneg %p305
        %p683 = pneg %p329
        %p684 = pneg %p326
        %p685 = pneg %p350
        %p686 = pneg %p347
        %p687 = pneg %p371
        %p688 = pneg %p368
        %p689 = pneg %p392
        %p690 = pneg %p389
        %p691 = pneg %p413
        %p692 = pneg %p410
        %p693 = pneg %p434
        %p694 = pneg %p431
        %p695 = pneg %p455
        %p696 = pneg %p452
        %p697 = pneg %p476
        %p698 = pneg %p473
        %s699 = smul.u32 2, %s35
        %p700 = scmp.lt.s32.totalorder %s699, 7
        %s701 = scalar_select %p700, %s699, 7
        %s702 = smul.addr %s701, 8
        %s703 = smul.addr %s702, 4
        %s704 = scalar_lea.vmem %s21, %s703
        %p705 = pneg %p502
        %p706 = pneg %p499
        %p707 = pneg %p523
        %p708 = pneg %p520
        %p709 = pneg %p544
        %p710 = pneg %p541
        %s711 = smul.u32 2, %s35
        %p712 = scmp.lt.s32.totalorder %s711, 7
        %s713 = scalar_select %p712, %s711, 7
        %s714 = smul.addr %s713, 8
        %s715 = scalar_lea.vmem %s0, %s714
        %s716 = smul.u32 2, %s35
        %s717 = smul.u32 2, %s35
        %p718 = scmp.lt.s32.totalorder %s717, 7
        %s719 = scalar_select %p718, %s717, 7
        %s720 = smul.addr %s719, 8
        %s721 = smul.addr %s720, 4
        %s722 = scalar_lea.vmem %s21, %s721
        %s723 = smul.u32 2, %s35
        %p725 = scmp.eq.s32.totalorder %s35, 0
        // Predicated region
        $region113: #{transformer_forward.1} parent=111 // pred_check
          %p726 = pneg %p725
        $region114: #{transformer_forward.1} parent=111 // pred_check_branch
          %728 = sbr.rel (%p726) target = $region116
        $region115: #{transformer_forward.1} parent=111 // pred_region
          %vm729 = vcmask 72704
          %730 = vst.msk [vmem:[#allocation2] sm:$0xff] %vm729, 0.0
        $region116: #{transformer_forward.1} parent=111 // pred_fallthru
          _
        %v731 = vld [vmem:[%s715] sm:$0xff]
        %v732 = vld [vmem:[%s715 + $0x8] sm:$0xff]
        %v733 = vpack.c.bf16 %v732, %v731
        %v734 = vld [vmem:[%s1] sm:$0xf]
        %v735 = vld [vmem:[%s1 + $0x4] sm:$0x7]
        %v736 = vld [vmem:[%s2] sm:$0x1]
        %v738 = vperm.slane %v736, 0
        %v742 = vunpack.c.l.b16 %v734
        %v743 = vunpack.c.l.b16 %v735
        %v744 = vpack.c.b16 %v743, %v742
        %vm745 = vcmask 105472
        %v747 = vsel %vm745, %v733, 0
        %vm749 = vcmask 1045504
        %vm750 = vcmask 1046528
        %v751 = vsel %vm749, 4294967295, 65535
        %v752 = vsel %vm750, %v751, 0
        %v754 = vand.u32 %v744, %v752
        %756 = vmatpush.bf16.msra.mxu0 0
        %757 = vmatpush.bf16.msra.mxu0 0
        %758 = vmatpush.bf16.msra.mxu0 0
        %759 = vmatpush.bf16.msra.mxu0 0
        %760 = vmatpush.bf16.msra.mxu0 0
        %761 = vmatpush.bf16.msra.mxu0 0
        %762 = vmatpush.bf16.msra.mxu0 0
        %763 = vmatpush.bf16.msra.mxu0 %v754
        %764 = vmatmul.bf16.gmra.mxu0 %v747
        %v765 = vpop.f32.mrf.mxu0
        %v766 = vadd.f32 %v738, %v765
        %v767 = vpop.f32.mrf.mxu0
        %v768 = vadd.f32 %v738, %v767
        %769 = vdwg.mxu0
        %v770 = vmax.f32 %v766, 0.0
        %v771 = vmax.f32 %v768, 0.0
        %v772 = vpack.c.bf16 %v771, %v770
        %v773 = vld [vmem:[%s3] sm:$0xf]
        %v774 = vld [vmem:[%s3 + $0x4] sm:$0xf]
        %v775 = vld [vmem:[%s3 + $0x8] sm:$0xf]
        %v776 = vld [vmem:[%s3 + $0xc] sm:$0xf]
        %v777 = vld [vmem:[%s3 + $0x10] sm:$0xf]
        %v778 = vld [vmem:[%s3 + $0x14] sm:$0xf]
        %v779 = vld [vmem:[%s3 + $0x18] sm:$0xf]
        %v780 = vld [vmem:[%s3 + $0x1c] sm:$0xf]
        %v781 = vld [vmem:[%s6] sm:$0x1]
        %v783 = vperm.slane %v781, 0
        %v793 = vunpack.c.l.b16 %v773
        %v794 = vunpack.c.l.b16 %v774
        %v795 = vunpack.c.l.b16 %v775
        %v796 = vunpack.c.l.b16 %v776
        %v797 = vunpack.c.l.b16 %v777
        %v798 = vunpack.c.l.b16 %v778
        %v799 = vunpack.c.l.b16 %v779
        %v800 = vunpack.c.l.b16 %v780
        %v801 = vpack.c.b16 %v794, %v793
        %v802 = vpack.c.b16 %v796, %v795
        %v803 = vpack.c.b16 %v798, %v797
        %v804 = vpack.c.b16 %v800, %v799
        %vm809 = vcmask 523264
        %v811 = vsel %vm809, %v772, 0
        %813 = vmatpush.bf16.msra.mxu0 0
        %814 = vmatpush.bf16.msra.mxu0 0
        %815 = vmatpush.bf16.msra.mxu0 0
        %816 = vmatpush.bf16.msra.mxu0 0
        %817 = vmatpush.bf16.msra.mxu0 %v804
        %818 = vmatpush.bf16.msra.mxu0 %v803
        %819 = vmatpush.bf16.msra.mxu0 %v802
        %820 = vmatpush.bf16.msra.mxu0 %v801
        %821 = vmatmul.bf16.gmra.mxu0 %v811
        %v822 = vpop.f32.mrf.mxu0
        %v823 = vadd.f32 %v783, %v822
        %v824 = vpop.f32.mrf.mxu0
        %v825 = vadd.f32 %v783, %v824
        %826 = vdwg.mxu0
        %v827 = vld [vmem:[%s4] sm:$0xf]
        %v828 = vld [vmem:[%s4 + $0x4] sm:$0xf]
        %v829 = vld [vmem:[%s4 + $0x8] sm:$0xf]
        %v830 = vld [vmem:[%s4 + $0xc] sm:$0xf]
        %v831 = vld [vmem:[%s4 + $0x10] sm:$0xf]
        %v832 = vld [vmem:[%s4 + $0x14] sm:$0xf]
        %v833 = vld [vmem:[%s4 + $0x18] sm:$0xf]
        %v834 = vld [vmem:[%s4 + $0x1c] sm:$0xf]
        %v835 = vld [vmem:[%s7] sm:$0x1]
        %v837 = vperm.slane %v835, 0
        %v847 = vunpack.c.l.b16 %v827
        %v848 = vunpack.c.l.b16 %v828
        %v849 = vunpack.c.l.b16 %v829
        %v850 = vunpack.c.l.b16 %v830
        %v851 = vunpack.c.l.b16 %v831
        %v852 = vunpack.c.l.b16 %v832
        %v853 = vunpack.c.l.b16 %v833
        %v854 = vunpack.c.l.b16 %v834
        %v855 = vpack.c.b16 %v848, %v847
        %v856 = vpack.c.b16 %v850, %v849
        %v857 = vpack.c.b16 %v852, %v851
        %v858 = vpack.c.b16 %v854, %v853
        %863 = vmatpush.bf16.msra.mxu0 0
        %864 = vmatpush.bf16.msra.mxu0 0
        %865 = vmatpush.bf16.msra.mxu0 0
        %866 = vmatpush.bf16.msra.mxu0 0
        %867 = vmatpush.bf16.msra.mxu0 %v858
        %868 = vmatpush.bf16.msra.mxu0 %v857
        %869 = vmatpush.bf16.msra.mxu0 %v856
        %870 = vmatpush.bf16.msra.mxu0 %v855
        %871 = vmatmul.bf16.gmra.mxu0 %v811
        %v872 = vpop.f32.mrf.mxu0
        %v873 = vadd.f32 %v837, %v872
        %v874 = vpop.f32.mrf.mxu0
        %v875 = vadd.f32 %v837, %v874
        %876 = vdwg.mxu0
        %v877 = vld [vmem:[%s5] sm:$0xf]
        %v878 = vld [vmem:[%s5 + $0x4] sm:$0xf]
        %v879 = vld [vmem:[%s5 + $0x8] sm:$0xf]
        %v880 = vld [vmem:[%s5 + $0xc] sm:$0xf]
        %v881 = vld [vmem:[%s5 + $0x10] sm:$0xf]
        %v882 = vld [vmem:[%s5 + $0x14] sm:$0xf]
        %v883 = vld [vmem:[%s5 + $0x18] sm:$0xf]
        %v884 = vld [vmem:[%s5 + $0x1c] sm:$0xf]
        %v885 = vld [vmem:[%s8] sm:$0x1]
        %v887 = vperm.slane %v885, 0
        %v897 = vunpack.c.l.b16 %v877
        %v898 = vunpack.c.l.b16 %v878
        %v899 = vunpack.c.l.b16 %v879
        %v900 = vunpack.c.l.b16 %v880
        %v901 = vunpack.c.l.b16 %v881
        %v902 = vunpack.c.l.b16 %v882
        %v903 = vunpack.c.l.b16 %v883
        %v904 = vunpack.c.l.b16 %v884
        %v905 = vpack.c.b16 %v898, %v897
        %v906 = vpack.c.b16 %v900, %v899
        %v907 = vpack.c.b16 %v902, %v901
        %v908 = vpack.c.b16 %v904, %v903
        %913 = vmatpush.bf16.msra.mxu0 0
        %914 = vmatpush.bf16.msra.mxu0 0
        %915 = vmatpush.bf16.msra.mxu0 0
        %916 = vmatpush.bf16.msra.mxu0 0
        %917 = vmatpush.bf16.msra.mxu0 %v908
        %918 = vmatpush.bf16.msra.mxu0 %v907
        %919 = vmatpush.bf16.msra.mxu0 %v906
        %920 = vmatpush.bf16.msra.mxu0 %v905
        %921 = vmatmul.bf16.gmra.mxu0 %v811
        %v922 = vpop.f32.mrf.mxu0
        %v923 = vadd.f32 %v887, %v922
        %v924 = vpop.f32.mrf.mxu0
        %v925 = vadd.f32 %v887, %v924
        %926 = vdwg.mxu0
        %v927 = vpack.c.bf16 %v823, %v823
        %v928 = vpack.c.bf16 %v825, %v825
        %v929 = vpack.c.bf16 %v873, %v873
        %v930 = vpack.c.bf16 %v875, %v875
        %v931 = vpack.c.bf16 %v923, %v923
        %v932 = vpack.c.bf16 %v925, %v925
        %v934 = vsel %vm809, %v927, 0
        %v937 = vsel %vm809, %v929, 0
        %939 = vmatpush.bf16.xpose.msra.mxu0 0
        %940 = vmatpush.bf16.xpose.msra.mxu0 0
        %941 = vmatpush.bf16.xpose.msra.mxu0 0
        %942 = vmatpush.bf16.xpose.msra.mxu0 0
        %943 = vmatpush.bf16.xpose.msra.mxu0 0
        %944 = vmatpush.bf16.xpose.msra.mxu0 0
        %945 = vmatpush.bf16.xpose.msra.mxu0 0
        %946 = vmatpush.bf16.xpose.msra.mxu0 %v937
        %947 = vmatmul.bf16.gmra.mxu0 %v934
        %v948 = vpop.f32.mrf.mxu0
        %v949 = vadd.f32 0.0, %v948
        %v950 = vpop.f32.mrf.mxu0
        %951 = vdwg.mxu0
        %v953 = vsel %vm809, %v928, 0
        %v956 = vsel %vm809, %v930, 0
        %958 = vmatpush.bf16.xpose.msra.mxu0 0
        %959 = vmatpush.bf16.xpose.msra.mxu0 0
        %960 = vmatpush.bf16.xpose.msra.mxu0 0
        %961 = vmatpush.bf16.xpose.msra.mxu0 0
        %962 = vmatpush.bf16.xpose.msra.mxu0 0
        %963 = vmatpush.bf16.xpose.msra.mxu0 0
        %964 = vmatpush.bf16.xpose.msra.mxu0 0
        %965 = vmatpush.bf16.xpose.msra.mxu0 %v956
        %966 = vmatmul.bf16.gmra.mxu0 %v953
        %v967 = vpop.f32.mrf.mxu0
        %v968 = vadd.f32 0.0, %v967
        %v969 = vpop.f32.mrf.mxu0
        %970 = vdwg.mxu0
        %v971 = vmul.f32 %v949, 0.125
        %v972 = vmul.f32 %v968, 0.125
        %vm973 = vcmask 64512
        %v974 = vsel %vm973, %v971, -inf
        %975 = vmax.xlane.f32.xlu0 %v974
        %v976 = vpop.xlane.xlu0 %975
        %v977 = vsel %vm973, %v972, -inf
        %978 = vmax.xlane.f32.xlu0 %v977
        %v979 = vpop.xlane.xlu0 %978
        %v980 = vsub.f32 %v971, %v976
        %v981 = vsub.f32 %v972, %v979
        %v982 = vmul.f32 %v980, 1.442695
        %v983 = vpow.pop %v982
        %v984 = vmul.f32 %v981, 1.442695
        %v985 = vpow.pop %v984
        %v986 = vsel %vm973, %v983, 0.0
        %987 = vadd.xlane.f32.xlu0 %v986
        %v988 = vpop.xlane.xlu0 %987
        %v989 = vsel %vm973, %v985, 0.0
        %990 = vadd.xlane.f32.xlu0 %v989
        %v991 = vpop.xlane.xlu0 %990
        %v992 = vrcp.pop %v988
        %v993 = vmul.f32 %v988, %v992
        %v994 = vsub.f32 1.0, %v993
        %v995 = vmul.f32 %v992, %v994
        %v996 = vadd.f32 %v992, %v995
        %vm997 = vweird.f32 %v988
        %vm998 = vweird.f32 %v992
        %vm999 = vmor %vm997, %vm998
        %v1000 = vsel %vm999, %v992, %v996
        %v1001 = vand.u32 2147483647, %v988
        %vm1002 = vcmp.eq.f32.partialorder %v1001, 8.507059e+37
        %v1003 = vand.u32 %v988, 2147483648
        %v1004 = vor.u32 1.1754944e-38, %v1003
        %v1005 = vsel %vm1002, %v1004, %v1000
        %v1006 = vmul.f32 %v983, %v1005
        %v1007 = vrcp.pop %v991
        %v1008 = vmul.f32 %v991, %v1007
        %v1009 = vsub.f32 1.0, %v1008
        %v1010 = vmul.f32 %v1007, %v1009
        %v1011 = vadd.f32 %v1007, %v1010
        %vm1012 = vweird.f32 %v991
        %vm1013 = vweird.f32 %v1007
        %vm1014 = vmor %vm1012, %vm1013
        %v1015 = vsel %vm1014, %v1007, %v1011
        %v1016 = vand.u32 2147483647, %v991
        %vm1017 = vcmp.eq.f32.partialorder %v1016, 8.507059e+37
        %v1018 = vand.u32 %v991, 2147483648
        %v1019 = vor.u32 1.1754944e-38, %v1018
        %v1020 = vsel %vm1017, %v1019, %v1015
        %v1021 = vmul.f32 %v985, %v1020
        %v1022 = vpack.c.bf16 %v1006, %v1006
        %v1023 = vpack.c.bf16 %v1021, %v1021
        %v1025 = vsel %vm973, %v1022, 0
        %vm1027 = vcmask 1043456
        %v1029 = vsel %vm1027, %v931, 0
        %1031 = vmatpush.bf16.msra.mxu0 0
        %1032 = vmatpush.bf16.msra.mxu0 0
        %1033 = vmatpush.bf16.msra.mxu0 0
        %1034 = vmatpush.bf16.msra.mxu0 0
        %1035 = vmatpush.bf16.msra.mxu0 0
        %1036 = vmatpush.bf16.msra.mxu0 0
        %1037 = vmatpush.bf16.msra.mxu0 0
        %1038 = vmatpush.bf16.msra.mxu0 %v1029
        %1039 = vmatmul.bf16.gmra.mxu0 %v1025
        %v1040 = vpop.f32.mrf.mxu0
        %v1041 = vadd.f32 0.0, %v1040
        %v1042 = vpop.f32.mrf.mxu0
        %1043 = vdwg.mxu0
        %v1045 = vsel %vm973, %v1023, 0
        %v1048 = vsel %vm1027, %v932, 0
        %1050 = vmatpush.bf16.msra.mxu0 0
        %1051 = vmatpush.bf16.msra.mxu0 0
        %1052 = vmatpush.bf16.msra.mxu0 0
        %1053 = vmatpush.bf16.msra.mxu0 0
        %1054 = vmatpush.bf16.msra.mxu0 0
        %1055 = vmatpush.bf16.msra.mxu0 0
        %1056 = vmatpush.bf16.msra.mxu0 0
        %1057 = vmatpush.bf16.msra.mxu0 %v1048
        %1058 = vmatmul.bf16.gmra.mxu0 %v1045
        %v1059 = vpop.f32.mrf.mxu0
        %v1060 = vadd.f32 0.0, %v1059
        %v1061 = vpop.f32.mrf.mxu0
        %1062 = vdwg.mxu0
        %v1063 = vpack.c.bf16 %v1060, %v1041
        %v1064 = vld [vmem:[%s9] sm:$0xf]
        %v1065 = vld [vmem:[%s9 + $0x4] sm:$0xf]
        %v1066 = vld [vmem:[%s9 + $0x8] sm:$0xf]
        %v1067 = vld [vmem:[%s9 + $0xc] sm:$0xf]
        %v1068 = vld [vmem:[%s9 + $0x10] sm:$0xf]
        %v1069 = vld [vmem:[%s9 + $0x14] sm:$0xf]
        %v1070 = vld [vmem:[%s9 + $0x18] sm:$0xf]
        %v1071 = vld [vmem:[%s9 + $0x1c] sm:$0xf]
        %v1072 = vld [vmem:[%s10] sm:$0x1]
        %v1074 = vperm.slane %v1072, 0
        %v1084 = vunpack.c.l.b16 %v1064
        %v1085 = vunpack.c.l.b16 %v1065
        %v1086 = vunpack.c.l.b16 %v1066
        %v1087 = vunpack.c.l.b16 %v1067
        %v1088 = vunpack.c.l.b16 %v1068
        %v1089 = vunpack.c.l.b16 %v1069
        %v1090 = vunpack.c.l.b16 %v1070
        %v1091 = vunpack.c.l.b16 %v1071
        %v1092 = vpack.c.b16 %v1085, %v1084
        %v1093 = vpack.c.b16 %v1087, %v1086
        %v1094 = vpack.c.b16 %v1089, %v1088
        %v1095 = vpack.c.b16 %v1091, %v1090
        %v1101 = vsel %vm809, %v1063, 0
        %1103 = vmatpush.bf16.msra.mxu0 0
        %1104 = vmatpush.bf16.msra.mxu0 0
        %1105 = vmatpush.bf16.msra.mxu0 0
        %1106 = vmatpush.bf16.msra.mxu0 0
        %1107 = vmatpush.bf16.msra.mxu0 %v1095
        %1108 = vmatpush.bf16.msra.mxu0 %v1094
        %1109 = vmatpush.bf16.msra.mxu0 %v1093
        %1110 = vmatpush.bf16.msra.mxu0 %v1092
        %1111 = vmatmul.bf16.gmra.mxu0 %v1101
        %v1112 = vpop.f32.mrf.mxu0
        %v1113 = vadd.f32 %v1074, %v1112
        %v1114 = vpop.f32.mrf.mxu0
        %v1115 = vadd.f32 %v1074, %v1114
        %1116 = vdwg.mxu0
        %v1117 = vadd.f32 %v770, %v1113
        %v1118 = vadd.f32 %v771, %v1115
        %v1119 = vld [vmem:[%s11] sm:$0x1]
        %v1120 = vld [vmem:[%s12] sm:$0x1]
        %v1121 = vsel %vm809, %v1117, 0.0
        %1122 = vadd.xlane.f32.xlu0 %v1121
        %v1123 = vpop.xlane.xlu0 %1122
        %v1124 = vsel %vm809, %v1118, 0.0
        %1125 = vadd.xlane.f32.xlu0 %v1124
        %v1126 = vpop.xlane.xlu0 %1125
        %v1127 = vrcp.pop 64.0
        %v1128 = vmul.f32 64.0, %v1127
        %v1129 = vsub.f32 1.0, %v1128
        %v1130 = vmul.f32 %v1127, %v1129
        %v1131 = vadd.f32 %v1127, %v1130
        %vm1132 = vweird.f32 %v1127
        %v1133 = vsel %vm1132, %v1127, %v1131
        %v1134 = vmul.f32 %v1123, %v1133
        %v1135 = vmul.f32 %v1126, %v1133
        %v1136 = vmul.f32 %v1117, %v1117
        %v1137 = vmul.f32 %v1118, %v1118
        %v1138 = vsel %vm809, %v1136, 0.0
        %1139 = vadd.xlane.f32.xlu0 %v1138
        %v1140 = vpop.xlane.xlu0 %1139
        %v1141 = vsel %vm809, %v1137, 0.0
        %1142 = vadd.xlane.f32.xlu0 %v1141
        %v1143 = vpop.xlane.xlu0 %1142
        %v1144 = vmul.f32 %v1140, %v1133
        %v1145 = vmul.f32 %v1143, %v1133
        %v1146 = vmul.f32 %v1134, %v1134
        %v1147 = vmul.f32 %v1135, %v1135
        %v1148 = vsub.f32 %v1144, %v1146
        %v1149 = vsub.f32 %v1145, %v1147
        %v1150 = vsub.f32 %v1117, %v1134
        %v1151 = vsub.f32 %v1118, %v1135
        %v1152 = vadd.f32 %v1148, 1e-05
        %v1153 = vadd.f32 %v1149, 1e-05
        %v1154 = vrsqrt.pop %v1152
        %v1155 = vmul.f32 %v1154, %v1152
        %v1156 = vmul.f32 %v1155, %v1154
        %v1157 = vmul.f32 0.5, %v1156
        %v1158 = vsub.f32 1.5, %v1157
        %v1159 = vmul.f32 %v1154, %v1158
        %vm1160 = vweird.f32 %v1152
        %vm1161 = vweird.f32 %v1154
        %vm1162 = vmor %vm1160, %vm1161
        %v1163 = vsel %vm1162, %v1154, %v1159
        %v1164 = vrsqrt.pop %v1153
        %v1165 = vmul.f32 %v1164, %v1153
        %v1166 = vmul.f32 %v1165, %v1164
        %v1167 = vmul.f32 0.5, %v1166
        %v1168 = vsub.f32 1.5, %v1167
        %v1169 = vmul.f32 %v1164, %v1168
        %vm1170 = vweird.f32 %v1153
        %vm1171 = vweird.f32 %v1164
        %vm1172 = vmor %vm1170, %vm1171
        %v1173 = vsel %vm1172, %v1164, %v1169
        %v1174 = vmul.f32 %v1150, %v1163
        %v1175 = vmul.f32 %v1151, %v1173
        %v1177 = vperm.slane %v1119, 0
        %v1179 = vmul.f32 %v1174, %v1177
        %v1180 = vmul.f32 %v1175, %v1177
        %v1182 = vperm.slane %v1120, 0
        %v1184 = vadd.f32 %v1179, %v1182
        %v1185 = vadd.f32 %v1180, %v1182
        %v1186 = vpack.c.bf16 %v1185, %v1184
        %v1187 = vld [vmem:[%s13] sm:$0xf]
        %v1188 = vld [vmem:[%s13 + $0x4] sm:$0xf]
        %v1189 = vld [vmem:[%s13 + $0x8] sm:$0xf]
        %v1190 = vld [vmem:[%s13 + $0xc] sm:$0xf]
        %v1191 = vld [vmem:[%s13 + $0x10] sm:$0xf]
        %v1192 = vld [vmem:[%s13 + $0x14] sm:$0xf]
        %v1193 = vld [vmem:[%s13 + $0x18] sm:$0xf]
        %v1194 = vld [vmem:[%s13 + $0x1c] sm:$0xf]
        %v1195 = vld [vmem:[%s14] sm:$0x1]
        %v1197 = vperm.slane %v1195, 0
        %v1207 = vunpack.c.l.b16 %v1187
        %v1208 = vunpack.c.l.b16 %v1188
        %v1209 = vunpack.c.l.b16 %v1189
        %v1210 = vunpack.c.l.b16 %v1190
        %v1211 = vunpack.c.l.b16 %v1191
        %v1212 = vunpack.c.l.b16 %v1192
        %v1213 = vunpack.c.l.b16 %v1193
        %v1214 = vunpack.c.l.b16 %v1194
        %v1215 = vpack.c.b16 %v1208, %v1207
        %v1216 = vpack.c.b16 %v1210, %v1209
        %v1217 = vpack.c.b16 %v1212, %v1211
        %v1218 = vpack.c.b16 %v1214, %v1213
        %v1224 = vsel %vm809, %v1186, 0
        %1226 = vmatpush.bf16.msra.mxu0 0
        %1227 = vmatpush.bf16.msra.mxu0 0
        %1228 = vmatpush.bf16.msra.mxu0 0
        %1229 = vmatpush.bf16.msra.mxu0 0
        %1230 = vmatpush.bf16.msra.mxu0 %v1218
        %1231 = vmatpush.bf16.msra.mxu0 %v1217
        %1232 = vmatpush.bf16.msra.mxu0 %v1216
        %1233 = vmatpush.bf16.msra.mxu0 %v1215
        %1234 = vmatmul.bf16.gmra.mxu0 %v1224
        %v1235 = vpop.f32.mrf.mxu0
        %v1236 = vadd.f32 %v1197, %v1235
        %v1237 = vpop.f32.mrf.mxu0
        %v1238 = vadd.f32 %v1197, %v1237
        %1239 = vdwg.mxu0
        %v1240 = vmax.f32 %v1236, 0.0
        %v1241 = vmax.f32 %v1238, 0.0
        %v1242 = vpack.c.bf16 %v1241, %v1240
        %v1243 = vld [vmem:[%s15] sm:$0xf]
        %v1244 = vld [vmem:[%s15 + $0x4] sm:$0xf]
        %v1245 = vld [vmem:[%s15 + $0x8] sm:$0xf]
        %v1246 = vld [vmem:[%s15 + $0xc] sm:$0xf]
        %v1247 = vld [vmem:[%s15 + $0x10] sm:$0xf]
        %v1248 = vld [vmem:[%s15 + $0x14] sm:$0xf]
        %v1249 = vld [vmem:[%s15 + $0x18] sm:$0xf]
        %v1250 = vld [vmem:[%s15 + $0x1c] sm:$0xf]
        %v1251 = vld [vmem:[%s15 + $0x20] sm:$0xf]
        %v1252 = vld [vmem:[%s15 + $0x24] sm:$0xf]
        %v1253 = vld [vmem:[%s15 + $0x28] sm:$0xf]
        %v1254 = vld [vmem:[%s15 + $0x2c] sm:$0xf]
        %v1255 = vld [vmem:[%s15 + $0x30] sm:$0xf]
        %v1256 = vld [vmem:[%s15 + $0x34] sm:$0xf]
        %v1257 = vld [vmem:[%s15 + $0x38] sm:$0xf]
        %v1258 = vld [vmem:[%s15 + $0x3c] sm:$0xf]
        %v1259 = vld [vmem:[%s16] sm:$0x1]
        %v1261 = vperm.slane %v1259, 0
        %v1279 = vunpack.c.l.b16 %v1243
        %v1280 = vunpack.c.l.b16 %v1244
        %v1281 = vunpack.c.l.b16 %v1245
        %v1282 = vunpack.c.l.b16 %v1246
        %v1283 = vunpack.c.l.b16 %v1247
        %v1284 = vunpack.c.l.b16 %v1248
        %v1285 = vunpack.c.l.b16 %v1249
        %v1286 = vunpack.c.l.b16 %v1250
        %v1287 = vunpack.c.l.b16 %v1251
        %v1288 = vunpack.c.l.b16 %v1252
        %v1289 = vunpack.c.l.b16 %v1253
        %v1290 = vunpack.c.l.b16 %v1254
        %v1291 = vunpack.c.l.b16 %v1255
        %v1292 = vunpack.c.l.b16 %v1256
        %v1293 = vunpack.c.l.b16 %v1257
        %v1294 = vunpack.c.l.b16 %v1258
        %v1295 = vpack.c.b16 %v1280, %v1279
        %v1296 = vpack.c.b16 %v1282, %v1281
        %v1297 = vpack.c.b16 %v1284, %v1283
        %v1298 = vpack.c.b16 %v1286, %v1285
        %v1299 = vpack.c.b16 %v1288, %v1287
        %v1300 = vpack.c.b16 %v1290, %v1289
        %v1301 = vpack.c.b16 %v1292, %v1291
        %v1302 = vpack.c.b16 %v1294, %v1293
        %1311 = vmatpush.bf16.msra.mxu0 %v1302
        %1312 = vmatpush.bf16.msra.mxu0 %v1301
        %1313 = vmatpush.bf16.msra.mxu0 %v1300
        %1314 = vmatpush.bf16.msra.mxu0 %v1299
        %1315 = vmatpush.bf16.msra.mxu0 %v1298
        %1316 = vmatpush.bf16.msra.mxu0 %v1297
        %1317 = vmatpush.bf16.msra.mxu0 %v1296
        %1318 = vmatpush.bf16.msra.mxu0 %v1295
        %1319 = vmatmul.bf16.gmra.mxu0 %v1242
        %v1320 = vpop.f32.mrf.mxu0
        %v1321 = vadd.f32 %v1261, %v1320
        %v1322 = vpop.f32.mrf.mxu0
        %v1323 = vadd.f32 %v1261, %v1322
        %1324 = vdwg.mxu0
        %v1325 = vadd.f32 %v1184, %v1321
        %v1326 = vadd.f32 %v1185, %v1323
        %v1327 = vld [vmem:[%s17] sm:$0x1]
        %v1328 = vld [vmem:[%s18] sm:$0x1]
        %v1329 = vsel %vm809, %v1325, 0.0
        %1330 = vadd.xlane.f32.xlu0 %v1329
        %v1331 = vpop.xlane.xlu0 %1330
        %v1332 = vsel %vm809, %v1326, 0.0
        %1333 = vadd.xlane.f32.xlu0 %v1332
        %v1334 = vpop.xlane.xlu0 %1333
        %v1335 = vmul.f32 %v1331, %v1133
        %v1336 = vmul.f32 %v1334, %v1133
        %v1337 = vmul.f32 %v1325, %v1325
        %v1338 = vmul.f32 %v1326, %v1326
        %v1339 = vsel %vm809, %v1337, 0.0
        %1340 = vadd.xlane.f32.xlu0 %v1339
        %v1341 = vpop.xlane.xlu0 %1340
        %v1342 = vsel %vm809, %v1338, 0.0
        %1343 = vadd.xlane.f32.xlu0 %v1342
        %v1344 = vpop.xlane.xlu0 %1343
        %v1345 = vmul.f32 %v1341, %v1133
        %v1346 = vmul.f32 %v1344, %v1133
        %v1347 = vmul.f32 %v1335, %v1335
        %v1348 = vmul.f32 %v1336, %v1336
        %v1349 = vsub.f32 %v1345, %v1347
        %v1350 = vsub.f32 %v1346, %v1348
        %v1351 = vsub.f32 %v1325, %v1335
        %v1352 = vsub.f32 %v1326, %v1336
        %v1353 = vadd.f32 %v1349, 1e-05
        %v1354 = vadd.f32 %v1350, 1e-05
        %v1355 = vrsqrt.pop %v1353
        %v1356 = vmul.f32 %v1355, %v1353
        %v1357 = vmul.f32 %v1356, %v1355
        %v1358 = vmul.f32 0.5, %v1357
        %v1359 = vsub.f32 1.5, %v1358
        %v1360 = vmul.f32 %v1355, %v1359
        %vm1361 = vweird.f32 %v1353
        %vm1362 = vweird.f32 %v1355
        %vm1363 = vmor %vm1361, %vm1362
        %v1364 = vsel %vm1363, %v1355, %v1360
        %v1365 = vrsqrt.pop %v1354
        %v1366 = vmul.f32 %v1365, %v1354
        %v1367 = vmul.f32 %v1366, %v1365
        %v1368 = vmul.f32 0.5, %v1367
        %v1369 = vsub.f32 1.5, %v1368
        %v1370 = vmul.f32 %v1365, %v1369
        %vm1371 = vweird.f32 %v1354
        %vm1372 = vweird.f32 %v1365
        %vm1373 = vmor %vm1371, %vm1372
        %v1374 = vsel %vm1373, %v1365, %v1370
        %v1375 = vmul.f32 %v1351, %v1364
        %v1376 = vmul.f32 %v1352, %v1374
        %v1378 = vperm.slane %v1327, 0
        %v1380 = vmul.f32 %v1375, %v1378
        %v1381 = vmul.f32 %v1376, %v1378
        %v1383 = vperm.slane %v1328, 0
        %v1385 = vadd.f32 %v1380, %v1383
        %v1386 = vadd.f32 %v1381, %v1383
        %v1387 = vpack.c.bf16 %v1386, %v1385
        %s1388 = scalar_lea.vmem %s3, 32
        %v1389 = vld [vmem:[%s1388] sm:$0xf]
        %v1390 = vld [vmem:[%s1388 + $0x4] sm:$0xf]
        %v1391 = vld [vmem:[%s1388 + $0x8] sm:$0xf]
        %v1392 = vld [vmem:[%s1388 + $0xc] sm:$0xf]
        %v1393 = vld [vmem:[%s1388 + $0x10] sm:$0xf]
        %v1394 = vld [vmem:[%s1388 + $0x14] sm:$0xf]
        %v1395 = vld [vmem:[%s1388 + $0x18] sm:$0xf]
        %v1396 = vld [vmem:[%s1388 + $0x1c] sm:$0xf]
        %s1397 = scalar_lea.vmem %s6, 1
        %v1398 = vld [vmem:[%s1397] sm:$0x1]
        %v1400 = vperm.slane %v1398, 0
        %v1410 = vunpack.c.l.b16 %v1389
        %v1411 = vunpack.c.l.b16 %v1390
        %v1412 = vunpack.c.l.b16 %v1391
        %v1413 = vunpack.c.l.b16 %v1392
        %v1414 = vunpack.c.l.b16 %v1393
        %v1415 = vunpack.c.l.b16 %v1394
        %v1416 = vunpack.c.l.b16 %v1395
        %v1417 = vunpack.c.l.b16 %v1396
        %v1418 = vpack.c.b16 %v1411, %v1410
        %v1419 = vpack.c.b16 %v1413, %v1412
        %v1420 = vpack.c.b16 %v1415, %v1414
        %v1421 = vpack.c.b16 %v1417, %v1416
        %v1427 = vsel %vm809, %v1387, 0
        %1429 = vmatpush.bf16.msra.mxu0 0
        %1430 = vmatpush.bf16.msra.mxu0 0
        %1431 = vmatpush.bf16.msra.mxu0 0
        %1432 = vmatpush.bf16.msra.mxu0 0
        %1433 = vmatpush.bf16.msra.mxu0 %v1421
        %1434 = vmatpush.bf16.msra.mxu0 %v1420
        %1435 = vmatpush.bf16.msra.mxu0 %v1419
        %1436 = vmatpush.bf16.msra.mxu0 %v1418
        %1437 = vmatmul.bf16.gmra.mxu0 %v1427
        %v1438 = vpop.f32.mrf.mxu0
        %v1439 = vadd.f32 %v1400, %v1438
        %v1440 = vpop.f32.mrf.mxu0
        %v1441 = vadd.f32 %v1400, %v1440
        %1442 = vdwg.mxu0
        %s1443 = scalar_lea.vmem %s4, 32
        %v1444 = vld [vmem:[%s1443] sm:$0xf]
        %v1445 = vld [vmem:[%s1443 + $0x4] sm:$0xf]
        %v1446 = vld [vmem:[%s1443 + $0x8] sm:$0xf]
        %v1447 = vld [vmem:[%s1443 + $0xc] sm:$0xf]
        %v1448 = vld [vmem:[%s1443 + $0x10] sm:$0xf]
        %v1449 = vld [vmem:[%s1443 + $0x14] sm:$0xf]
        %v1450 = vld [vmem:[%s1443 + $0x18] sm:$0xf]
        %v1451 = vld [vmem:[%s1443 + $0x1c] sm:$0xf]
        %s1452 = scalar_lea.vmem %s7, 1
        %v1453 = vld [vmem:[%s1452] sm:$0x1]
        %v1455 = vperm.slane %v1453, 0
        %v1465 = vunpack.c.l.b16 %v1444
        %v1466 = vunpack.c.l.b16 %v1445
        %v1467 = vunpack.c.l.b16 %v1446
        %v1468 = vunpack.c.l.b16 %v1447
        %v1469 = vunpack.c.l.b16 %v1448
        %v1470 = vunpack.c.l.b16 %v1449
        %v1471 = vunpack.c.l.b16 %v1450
        %v1472 = vunpack.c.l.b16 %v1451
        %v1473 = vpack.c.b16 %v1466, %v1465
        %v1474 = vpack.c.b16 %v1468, %v1467
        %v1475 = vpack.c.b16 %v1470, %v1469
        %v1476 = vpack.c.b16 %v1472, %v1471
        %1481 = vmatpush.bf16.msra.mxu0 0
        %1482 = vmatpush.bf16.msra.mxu0 0
        %1483 = vmatpush.bf16.msra.mxu0 0
        %1484 = vmatpush.bf16.msra.mxu0 0
        %1485 = vmatpush.bf16.msra.mxu0 %v1476
        %1486 = vmatpush.bf16.msra.mxu0 %v1475
        %1487 = vmatpush.bf16.msra.mxu0 %v1474
        %1488 = vmatpush.bf16.msra.mxu0 %v1473
        %1489 = vmatmul.bf16.gmra.mxu0 %v1427
        %v1490 = vpop.f32.mrf.mxu0
        %v1491 = vadd.f32 %v1455, %v1490
        %v1492 = vpop.f32.mrf.mxu0
        %v1493 = vadd.f32 %v1455, %v1492
        %1494 = vdwg.mxu0
        %s1495 = scalar_lea.vmem %s5, 32
        %v1496 = vld [vmem:[%s1495] sm:$0xf]
        %v1497 = vld [vmem:[%s1495 + $0x4] sm:$0xf]
        %v1498 = vld [vmem:[%s1495 + $0x8] sm:$0xf]
        %v1499 = vld [vmem:[%s1495 + $0xc] sm:$0xf]
        %v1500 = vld [vmem:[%s1495 + $0x10] sm:$0xf]
        %v1501 = vld [vmem:[%s1495 + $0x14] sm:$0xf]
        %v1502 = vld [vmem:[%s1495 + $0x18] sm:$0xf]
        %v1503 = vld [vmem:[%s1495 + $0x1c] sm:$0xf]
        %s1504 = scalar_lea.vmem %s8, 1
        %v1505 = vld [vmem:[%s1504] sm:$0x1]
        %v1507 = vperm.slane %v1505, 0
        %v1517 = vunpack.c.l.b16 %v1496
        %v1518 = vunpack.c.l.b16 %v1497
        %v1519 = vunpack.c.l.b16 %v1498
        %v1520 = vunpack.c.l.b16 %v1499
        %v1521 = vunpack.c.l.b16 %v1500
        %v1522 = vunpack.c.l.b16 %v1501
        %v1523 = vunpack.c.l.b16 %v1502
        %v1524 = vunpack.c.l.b16 %v1503
        %v1525 = vpack.c.b16 %v1518, %v1517
        %v1526 = vpack.c.b16 %v1520, %v1519
        %v1527 = vpack.c.b16 %v1522, %v1521
        %v1528 = vpack.c.b16 %v1524, %v1523
        %1533 = vmatpush.bf16.msra.mxu0 0
        %1534 = vmatpush.bf16.msra.mxu0 0
        %1535 = vmatpush.bf16.msra.mxu0 0
        %1536 = vmatpush.bf16.msra.mxu0 0
        %1537 = vmatpush.bf16.msra.mxu0 %v1528
        %1538 = vmatpush.bf16.msra.mxu0 %v1527
        %1539 = vmatpush.bf16.msra.mxu0 %v1526
        %1540 = vmatpush.bf16.msra.mxu0 %v1525
        %1541 = vmatmul.bf16.gmra.mxu0 %v1427
        %v1542 = vpop.f32.mrf.mxu0
        %v1543 = vadd.f32 %v1507, %v1542
        %v1544 = vpop.f32.mrf.mxu0
        %v1545 = vadd.f32 %v1507, %v1544
        %1546 = vdwg.mxu0
        %v1547 = vpack.c.bf16 %v1439, %v1439
        %v1548 = vpack.c.bf16 %v1441, %v1441
        %v1549 = vpack.c.bf16 %v1491, %v1491
        %v1550 = vpack.c.bf16 %v1493, %v1493
        %v1551 = vpack.c.bf16 %v1543, %v1543
        %v1552 = vpack.c.bf16 %v1545, %v1545
        %v1554 = vsel %vm809, %v1547, 0
        %v1557 = vsel %vm809, %v1549, 0
        %1559 = vmatpush.bf16.xpose.msra.mxu0 0
        %1560 = vmatpush.bf16.xpose.msra.mxu0 0
        %1561 = vmatpush.bf16.xpose.msra.mxu0 0
        %1562 = vmatpush.bf16.xpose.msra.mxu0 0
        %1563 = vmatpush.bf16.xpose.msra.mxu0 0
        %1564 = vmatpush.bf16.xpose.msra.mxu0 0
        %1565 = vmatpush.bf16.xpose.msra.mxu0 0
        %1566 = vmatpush.bf16.xpose.msra.mxu0 %v1557
        %1567 = vmatmul.bf16.gmra.mxu0 %v1554
        %v1568 = vpop.f32.mrf.mxu0
        %v1569 = vadd.f32 0.0, %v1568
        %v1570 = vpop.f32.mrf.mxu0
        %1571 = vdwg.mxu0
        %v1573 = vsel %vm809, %v1548, 0
        %v1576 = vsel %vm809, %v1550, 0
        %1578 = vmatpush.bf16.xpose.msra.mxu0 0
        %1579 = vmatpush.bf16.xpose.msra.mxu0 0
        %1580 = vmatpush.bf16.xpose.msra.mxu0 0
        %1581 = vmatpush.bf16.xpose.msra.mxu0 0
        %1582 = vmatpush.bf16.xpose.msra.mxu0 0
        %1583 = vmatpush.bf16.xpose.msra.mxu0 0
        %1584 = vmatpush.bf16.xpose.msra.mxu0 0
        %1585 = vmatpush.bf16.xpose.msra.mxu0 %v1576
        %1586 = vmatmul.bf16.gmra.mxu0 %v1573
        %v1587 = vpop.f32.mrf.mxu0
        %v1588 = vadd.f32 0.0, %v1587
        %v1589 = vpop.f32.mrf.mxu0
        %1590 = vdwg.mxu0
        %v1591 = vmul.f32 %v1569, 0.125
        %v1592 = vmul.f32 %v1588, 0.125
        %v1593 = vsel %vm973, %v1591, -inf
        %1594 = vmax.xlane.f32.xlu0 %v1593
        %v1595 = vpop.xlane.xlu0 %1594
        %v1596 = vsel %vm973, %v1592, -inf
        %1597 = vmax.xlane.f32.xlu0 %v1596
        %v1598 = vpop.xlane.xlu0 %1597
        %v1599 = vsub.f32 %v1591, %v1595
        %v1600 = vsub.f32 %v1592, %v1598
        %v1601 = vmul.f32 %v1599, 1.442695
        %v1602 = vpow.pop %v1601
        %v1603 = vmul.f32 %v1600, 1.442695
        %v1604 = vpow.pop %v1603
        %v1605 = vsel %vm973, %v1602, 0.0
        %1606 = vadd.xlane.f32.xlu0 %v1605
        %v1607 = vpop.xlane.xlu0 %1606
        %v1608 = vsel %vm973, %v1604, 0.0
        %1609 = vadd.xlane.f32.xlu0 %v1608
        %v1610 = vpop.xlane.xlu0 %1609
        %v1611 = vrcp.pop %v1607
        %v1612 = vmul.f32 %v1607, %v1611
        %v1613 = vsub.f32 1.0, %v1612
        %v1614 = vmul.f32 %v1611, %v1613
        %v1615 = vadd.f32 %v1611, %v1614
        %vm1616 = vweird.f32 %v1607
        %vm1617 = vweird.f32 %v1611
        %vm1618 = vmor %vm1616, %vm1617
        %v1619 = vsel %vm1618, %v1611, %v1615
        %v1620 = vand.u32 2147483647, %v1607
        %vm1621 = vcmp.eq.f32.partialorder %v1620, 8.507059e+37
        %v1622 = vand.u32 %v1607, 2147483648
        %v1623 = vor.u32 1.1754944e-38, %v1622
        %v1624 = vsel %vm1621, %v1623, %v1619
        %v1625 = vmul.f32 %v1602, %v1624
        %v1626 = vrcp.pop %v1610
        %v1627 = vmul.f32 %v1610, %v1626
        %v1628 = vsub.f32 1.0, %v1627
        %v1629 = vmul.f32 %v1626, %v1628
        %v1630 = vadd.f32 %v1626, %v1629
        %vm1631 = vweird.f32 %v1610
        %vm1632 = vweird.f32 %v1626
        %vm1633 = vmor %vm1631, %vm1632
        %v1634 = vsel %vm1633, %v1626, %v1630
        %v1635 = vand.u32 2147483647, %v1610
        %vm1636 = vcmp.eq.f32.partialorder %v1635, 8.507059e+37
        %v1637 = vand.u32 %v1610, 2147483648
        %v1638 = vor.u32 1.1754944e-38, %v1637
        %v1639 = vsel %vm1636, %v1638, %v1634
        %v1640 = vmul.f32 %v1604, %v1639
        %v1641 = vpack.c.bf16 %v1625, %v1625
        %v1642 = vpack.c.bf16 %v1640, %v1640
        %v1644 = vsel %vm973, %v1641, 0
        %v1647 = vsel %vm1027, %v1551, 0
        %1649 = vmatpush.bf16.msra.mxu0 0
        %1650 = vmatpush.bf16.msra.mxu0 0
        %1651 = vmatpush.bf16.msra.mxu0 0
        %1652 = vmatpush.bf16.msra.mxu0 0
        %1653 = vmatpush.bf16.msra.mxu0 0
        %1654 = vmatpush.bf16.msra.mxu0 0
        %1655 = vmatpush.bf16.msra.mxu0 0
        %1656 = vmatpush.bf16.msra.mxu0 %v1647
        %1657 = vmatmul.bf16.gmra.mxu0 %v1644
        %v1658 = vpop.f32.mrf.mxu0
        %v1659 = vadd.f32 0.0, %v1658
        %v1660 = vpop.f32.mrf.mxu0
        %1661 = vdwg.mxu0
        %v1663 = vsel %vm973, %v1642, 0
        %v1666 = vsel %vm1027, %v1552, 0
        %1668 = vmatpush.bf16.msra.mxu0 0
        %1669 = vmatpush.bf16.msra.mxu0 0
        %1670 = vmatpush.bf16.msra.mxu0 0
        %1671 = vmatpush.bf16.msra.mxu0 0
        %1672 = vmatpush.bf16.msra.mxu0 0
        %1673 = vmatpush.bf16.msra.mxu0 0
        %1674 = vmatpush.bf16.msra.mxu0 0
        %1675 = vmatpush.bf16.msra.mxu0 %v1666
        %1676 = vmatmul.bf16.gmra.mxu0 %v1663
        %v1677 = vpop.f32.mrf.mxu0
        %v1678 = vadd.f32 0.0, %v1677
        %v1679 = vpop.f32.mrf.mxu0
        %1680 = vdwg.mxu0
        %v1681 = vpack.c.bf16 %v1678, %v1659
        %s1682 = scalar_lea.vmem %s9, 32
        %v1683 = vld [vmem:[%s1682] sm:$0xf]
        %v1684 = vld [vmem:[%s1682 + $0x4] sm:$0xf]
        %v1685 = vld [vmem:[%s1682 + $0x8] sm:$0xf]
        %v1686 = vld [vmem:[%s1682 + $0xc] sm:$0xf]
        %v1687 = vld [vmem:[%s1682 + $0x10] sm:$0xf]
        %v1688 = vld [vmem:[%s1682 + $0x14] sm:$0xf]
        %v1689 = vld [vmem:[%s1682 + $0x18] sm:$0xf]
        %v1690 = vld [vmem:[%s1682 + $0x1c] sm:$0xf]
        %s1691 = scalar_lea.vmem %s10, 1
        %v1692 = vld [vmem:[%s1691] sm:$0x1]
        %v1694 = vperm.slane %v1692, 0
        %v1704 = vunpack.c.l.b16 %v1683
        %v1705 = vunpack.c.l.b16 %v1684
        %v1706 = vunpack.c.l.b16 %v1685
        %v1707 = vunpack.c.l.b16 %v1686
        %v1708 = vunpack.c.l.b16 %v1687
        %v1709 = vunpack.c.l.b16 %v1688
        %v1710 = vunpack.c.l.b16 %v1689
        %v1711 = vunpack.c.l.b16 %v1690
        %v1712 = vpack.c.b16 %v1705, %v1704
        %v1713 = vpack.c.b16 %v1707, %v1706
        %v1714 = vpack.c.b16 %v1709, %v1708
        %v1715 = vpack.c.b16 %v1711, %v1710
        %v1721 = vsel %vm809, %v1681, 0
        %1723 = vmatpush.bf16.msra.mxu0 0
        %1724 = vmatpush.bf16.msra.mxu0 0
        %1725 = vmatpush.bf16.msra.mxu0 0
        %1726 = vmatpush.bf16.msra.mxu0 0
        %1727 = vmatpush.bf16.msra.mxu0 %v1715
        %1728 = vmatpush.bf16.msra.mxu0 %v1714
        %1729 = vmatpush.bf16.msra.mxu0 %v1713
        %1730 = vmatpush.bf16.msra.mxu0 %v1712
        %1731 = vmatmul.bf16.gmra.mxu0 %v1721
        %v1732 = vpop.f32.mrf.mxu0
        %v1733 = vadd.f32 %v1694, %v1732
        %v1734 = vpop.f32.mrf.mxu0
        %v1735 = vadd.f32 %v1694, %v1734
        %1736 = vdwg.mxu0
        %v1737 = vadd.f32 %v1385, %v1733
        %v1738 = vadd.f32 %v1386, %v1735
        %s1739 = scalar_lea.vmem %s11, 1
        %v1740 = vld [vmem:[%s1739] sm:$0x1]
        %s1741 = scalar_lea.vmem %s12, 1
        %v1742 = vld [vmem:[%s1741] sm:$0x1]
        %v1743 = vsel %vm809, %v1737, 0.0
        %1744 = vadd.xlane.f32.xlu0 %v1743
        %v1745 = vpop.xlane.xlu0 %1744
        %v1746 = vsel %vm809, %v1738, 0.0
        %1747 = vadd.xlane.f32.xlu0 %v1746
        %v1748 = vpop.xlane.xlu0 %1747
        %v1749 = vmul.f32 %v1745, %v1133
        %v1750 = vmul.f32 %v1748, %v1133
        %v1751 = vmul.f32 %v1737, %v1737
        %v1752 = vmul.f32 %v1738, %v1738
        %v1753 = vsel %vm809, %v1751, 0.0
        %1754 = vadd.xlane.f32.xlu0 %v1753
        %v1755 = vpop.xlane.xlu0 %1754
        %v1756 = vsel %vm809, %v1752, 0.0
        %1757 = vadd.xlane.f32.xlu0 %v1756
        %v1758 = vpop.xlane.xlu0 %1757
        %v1759 = vmul.f32 %v1755, %v1133
        %v1760 = vmul.f32 %v1758, %v1133
        %v1761 = vmul.f32 %v1749, %v1749
        %v1762 = vmul.f32 %v1750, %v1750
        %v1763 = vsub.f32 %v1759, %v1761
        %v1764 = vsub.f32 %v1760, %v1762
        %v1765 = vsub.f32 %v1737, %v1749
        %v1766 = vsub.f32 %v1738, %v1750
        %v1767 = vadd.f32 %v1763, 1e-05
        %v1768 = vadd.f32 %v1764, 1e-05
        %v1769 = vrsqrt.pop %v1767
        %v1770 = vmul.f32 %v1769, %v1767
        %v1771 = vmul.f32 %v1770, %v1769
        %v1772 = vmul.f32 0.5, %v1771
        %v1773 = vsub.f32 1.5, %v1772
        %v1774 = vmul.f32 %v1769, %v1773
        %vm1775 = vweird.f32 %v1767
        %vm1776 = vweird.f32 %v1769
        %vm1777 = vmor %vm1775, %vm1776
        %v1778 = vsel %vm1777, %v1769, %v1774
        %v1779 = vrsqrt.pop %v1768
        %v1780 = vmul.f32 %v1779, %v1768
        %v1781 = vmul.f32 %v1780, %v1779
        %v1782 = vmul.f32 0.5, %v1781
        %v1783 = vsub.f32 1.5, %v1782
        %v1784 = vmul.f32 %v1779, %v1783
        %vm1785 = vweird.f32 %v1768
        %vm1786 = vweird.f32 %v1779
        %vm1787 = vmor %vm1785, %vm1786
        %v1788 = vsel %vm1787, %v1779, %v1784
        %v1789 = vmul.f32 %v1765, %v1778
        %v1790 = vmul.f32 %v1766, %v1788
        %v1792 = vperm.slane %v1740, 0
        %v1794 = vmul.f32 %v1789, %v1792
        %v1795 = vmul.f32 %v1790, %v1792
        %v1797 = vperm.slane %v1742, 0
        %v1799 = vadd.f32 %v1794, %v1797
        %v1800 = vadd.f32 %v1795, %v1797
        %v1801 = vpack.c.bf16 %v1800, %v1799
        %s1802 = scalar_lea.vmem %s13, 32
        %v1803 = vld [vmem:[%s1802] sm:$0xf]
        %v1804 = vld [vmem:[%s1802 + $0x4] sm:$0xf]
        %v1805 = vld [vmem:[%s1802 + $0x8] sm:$0xf]
        %v1806 = vld [vmem:[%s1802 + $0xc] sm:$0xf]
        %v1807 = vld [vmem:[%s1802 + $0x10] sm:$0xf]
        %v1808 = vld [vmem:[%s1802 + $0x14] sm:$0xf]
        %v1809 = vld [vmem:[%s1802 + $0x18] sm:$0xf]
        %v1810 = vld [vmem:[%s1802 + $0x1c] sm:$0xf]
        %s1811 = scalar_lea.vmem %s14, 1
        %v1812 = vld [vmem:[%s1811] sm:$0x1]
        %v1814 = vperm.slane %v1812, 0
        %v1824 = vunpack.c.l.b16 %v1803
        %v1825 = vunpack.c.l.b16 %v1804
        %v1826 = vunpack.c.l.b16 %v1805
        %v1827 = vunpack.c.l.b16 %v1806
        %v1828 = vunpack.c.l.b16 %v1807
        %v1829 = vunpack.c.l.b16 %v1808
        %v1830 = vunpack.c.l.b16 %v1809
        %v1831 = vunpack.c.l.b16 %v1810
        %v1832 = vpack.c.b16 %v1825, %v1824
        %v1833 = vpack.c.b16 %v1827, %v1826
        %v1834 = vpack.c.b16 %v1829, %v1828
        %v1835 = vpack.c.b16 %v1831, %v1830
        %v1841 = vsel %vm809, %v1801, 0
        %1843 = vmatpush.bf16.msra.mxu0 0
        %1844 = vmatpush.bf16.msra.mxu0 0
        %1845 = vmatpush.bf16.msra.mxu0 0
        %1846 = vmatpush.bf16.msra.mxu0 0
        %1847 = vmatpush.bf16.msra.mxu0 %v1835
        %1848 = vmatpush.bf16.msra.mxu0 %v1834
        %1849 = vmatpush.bf16.msra.mxu0 %v1833
        %1850 = vmatpush.bf16.msra.mxu0 %v1832
        %1851 = vmatmul.bf16.gmra.mxu0 %v1841
        %v1852 = vpop.f32.mrf.mxu0
        %v1853 = vadd.f32 %v1814, %v1852
        %v1854 = vpop.f32.mrf.mxu0
        %v1855 = vadd.f32 %v1814, %v1854
        %1856 = vdwg.mxu0
        %v1857 = vmax.f32 %v1853, 0.0
        %v1858 = vmax.f32 %v1855, 0.0
        %v1859 = vpack.c.bf16 %v1858, %v1857
        %s1860 = scalar_lea.vmem %s15, 64
        %v1861 = vld [vmem:[%s1860] sm:$0xf]
        %v1862 = vld [vmem:[%s1860 + $0x4] sm:$0xf]
        %v1863 = vld [vmem:[%s1860 + $0x8] sm:$0xf]
        %v1864 = vld [vmem:[%s1860 + $0xc] sm:$0xf]
        %v1865 = vld [vmem:[%s1860 + $0x10] sm:$0xf]
        %v1866 = vld [vmem:[%s1860 + $0x14] sm:$0xf]
        %v1867 = vld [vmem:[%s1860 + $0x18] sm:$0xf]
        %v1868 = vld [vmem:[%s1860 + $0x1c] sm:$0xf]
        %v1869 = vld [vmem:[%s1860 + $0x20] sm:$0xf]
        %v1870 = vld [vmem:[%s1860 + $0x24] sm:$0xf]
        %v1871 = vld [vmem:[%s1860 + $0x28] sm:$0xf]
        %v1872 = vld [vmem:[%s1860 + $0x2c] sm:$0xf]
        %v1873 = vld [vmem:[%s1860 + $0x30] sm:$0xf]
        %v1874 = vld [vmem:[%s1860 + $0x34] sm:$0xf]
        %v1875 = vld [vmem:[%s1860 + $0x38] sm:$0xf]
        %v1876 = vld [vmem:[%s1860 + $0x3c] sm:$0xf]
        %s1877 = scalar_lea.vmem %s16, 1
        %v1878 = vld [vmem:[%s1877] sm:$0x1]
        %v1880 = vperm.slane %v1878, 0
        %v1898 = vunpack.c.l.b16 %v1861
        %v1899 = vunpack.c.l.b16 %v1862
        %v1900 = vunpack.c.l.b16 %v1863
        %v1901 = vunpack.c.l.b16 %v1864
        %v1902 = vunpack.c.l.b16 %v1865
        %v1903 = vunpack.c.l.b16 %v1866
        %v1904 = vunpack.c.l.b16 %v1867
        %v1905 = vunpack.c.l.b16 %v1868
        %v1906 = vunpack.c.l.b16 %v1869
        %v1907 = vunpack.c.l.b16 %v1870
        %v1908 = vunpack.c.l.b16 %v1871
        %v1909 = vunpack.c.l.b16 %v1872
        %v1910 = vunpack.c.l.b16 %v1873
        %v1911 = vunpack.c.l.b16 %v1874
        %v1912 = vunpack.c.l.b16 %v1875
        %v1913 = vunpack.c.l.b16 %v1876
        %v1914 = vpack.c.b16 %v1899, %v1898
        %v1915 = vpack.c.b16 %v1901, %v1900
        %v1916 = vpack.c.b16 %v1903, %v1902
        %v1917 = vpack.c.b16 %v1905, %v1904
        %v1918 = vpack.c.b16 %v1907, %v1906
        %v1919 = vpack.c.b16 %v1909, %v1908
        %v1920 = vpack.c.b16 %v1911, %v1910
        %v1921 = vpack.c.b16 %v1913, %v1912
        %1930 = vmatpush.bf16.msra.mxu0 %v1921
        %1931 = vmatpush.bf16.msra.mxu0 %v1920
        %1932 = vmatpush.bf16.msra.mxu0 %v1919
        %1933 = vmatpush.bf16.msra.mxu0 %v1918
        %1934 = vmatpush.bf16.msra.mxu0 %v1917
        %1935 = vmatpush.bf16.msra.mxu0 %v1916
        %1936 = vmatpush.bf16.msra.mxu0 %v1915
        %1937 = vmatpush.bf16.msra.mxu0 %v1914
        %1938 = vmatmul.bf16.gmra.mxu0 %v1859
        %v1939 = vpop.f32.mrf.mxu0
        %v1940 = vadd.f32 %v1880, %v1939
        %v1941 = vpop.f32.mrf.mxu0
        %v1942 = vadd.f32 %v1880, %v1941
        %1943 = vdwg.mxu0
        %v1944 = vadd.f32 %v1799, %v1940
        %v1945 = vadd.f32 %v1800, %v1942
        %s1946 = scalar_lea.vmem %s17, 1
        %v1947 = vld [vmem:[%s1946] sm:$0x1]
        %s1948 = scalar_lea.vmem %s18, 1
        %v1949 = vld [vmem:[%s1948] sm:$0x1]
        %v1950 = vsel %vm809, %v1944, 0.0
        %1951 = vadd.xlane.f32.xlu0 %v1950
        %v1952 = vpop.xlane.xlu0 %1951
        %v1953 = vsel %vm809, %v1945, 0.0
        %1954 = vadd.xlane.f32.xlu0 %v1953
        %v1955 = vpop.xlane.xlu0 %1954
        %v1956 = vmul.f32 %v1952, %v1133
        %v1957 = vmul.f32 %v1955, %v1133
        %v1958 = vmul.f32 %v1944, %v1944
        %v1959 = vmul.f32 %v1945, %v1945
        %v1960 = vsel %vm809, %v1958, 0.0
        %1961 = vadd.xlane.f32.xlu0 %v1960
        %v1962 = vpop.xlane.xlu0 %1961
        %v1963 = vsel %vm809, %v1959, 0.0
        %1964 = vadd.xlane.f32.xlu0 %v1963
        %v1965 = vpop.xlane.xlu0 %1964
        %v1966 = vmul.f32 %v1962, %v1133
        %v1967 = vmul.f32 %v1965, %v1133
        %v1968 = vmul.f32 %v1956, %v1956
        %v1969 = vmul.f32 %v1957, %v1957
        %v1970 = vsub.f32 %v1966, %v1968
        %v1971 = vsub.f32 %v1967, %v1969
        %v1972 = vsub.f32 %v1944, %v1956
        %v1973 = vsub.f32 %v1945, %v1957
        %v1974 = vadd.f32 %v1970, 1e-05
        %v1975 = vadd.f32 %v1971, 1e-05
        %v1976 = vrsqrt.pop %v1974
        %v1977 = vmul.f32 %v1976, %v1974
        %v1978 = vmul.f32 %v1977, %v1976
        %v1979 = vmul.f32 0.5, %v1978
        %v1980 = vsub.f32 1.5, %v1979
        %v1981 = vmul.f32 %v1976, %v1980
        %vm1982 = vweird.f32 %v1974
        %vm1983 = vweird.f32 %v1976
        %vm1984 = vmor %vm1982, %vm1983
        %v1985 = vsel %vm1984, %v1976, %v1981
        %v1986 = vrsqrt.pop %v1975
        %v1987 = vmul.f32 %v1986, %v1975
        %v1988 = vmul.f32 %v1987, %v1986
        %v1989 = vmul.f32 0.5, %v1988
        %v1990 = vsub.f32 1.5, %v1989
        %v1991 = vmul.f32 %v1986, %v1990
        %vm1992 = vweird.f32 %v1975
        %vm1993 = vweird.f32 %v1986
        %vm1994 = vmor %vm1992, %vm1993
        %v1995 = vsel %vm1994, %v1986, %v1991
        %v1996 = vmul.f32 %v1972, %v1985
        %v1997 = vmul.f32 %v1973, %v1995
        %v1999 = vperm.slane %v1947, 0
        %v2001 = vmul.f32 %v1996, %v1999
        %v2002 = vmul.f32 %v1997, %v1999
        %v2004 = vperm.slane %v1949, 0
        %v2006 = vadd.f32 %v2001, %v2004
        %v2007 = vadd.f32 %v2002, %v2004
        %v2008 = vld [vmem:[%s19] sm:$0x1]
        %v2009 = vld [vmem:[%s20] sm:$0x1]
        %v2010 = vsel %vm809, %v2006, 0.0
        %2011 = vadd.xlane.f32.xlu0 %v2010
        %v2012 = vpop.xlane.xlu0 %2011
        %v2013 = vsel %vm809, %v2007, 0.0
        %2014 = vadd.xlane.f32.xlu0 %v2013
        %v2015 = vpop.xlane.xlu0 %2014
        %v2016 = vmul.f32 %v2012, %v1133
        %v2017 = vmul.f32 %v2015, %v1133
        %v2018 = vmul.f32 %v2006, %v2006
        %v2019 = vmul.f32 %v2007, %v2007
        %v2020 = vsel %vm809, %v2018, 0.0
        %2021 = vadd.xlane.f32.xlu0 %v2020
        %v2022 = vpop.xlane.xlu0 %2021
        %v2023 = vsel %vm809, %v2019, 0.0
        %2024 = vadd.xlane.f32.xlu0 %v2023
        %v2025 = vpop.xlane.xlu0 %2024
        %v2026 = vmul.f32 %v2022, %v1133
        %v2027 = vmul.f32 %v2025, %v1133
        %v2028 = vmul.f32 %v2016, %v2016
        %v2029 = vmul.f32 %v2017, %v2017
        %v2030 = vsub.f32 %v2026, %v2028
        %v2031 = vsub.f32 %v2027, %v2029
        %v2032 = vsub.f32 %v2006, %v2016
        %v2033 = vsub.f32 %v2007, %v2017
        %v2034 = vadd.f32 %v2030, 1e-05
        %v2035 = vadd.f32 %v2031, 1e-05
        %v2036 = vrsqrt.pop %v2034
        %v2037 = vmul.f32 %v2036, %v2034
        %v2038 = vmul.f32 %v2037, %v2036
        %v2039 = vmul.f32 0.5, %v2038
        %v2040 = vsub.f32 1.5, %v2039
        %v2041 = vmul.f32 %v2036, %v2040
        %vm2042 = vweird.f32 %v2034
        %vm2043 = vweird.f32 %v2036
        %vm2044 = vmor %vm2042, %vm2043
        %v2045 = vsel %vm2044, %v2036, %v2041
        %v2046 = vrsqrt.pop %v2035
        %v2047 = vmul.f32 %v2046, %v2035
        %v2048 = vmul.f32 %v2047, %v2046
        %v2049 = vmul.f32 0.5, %v2048
        %v2050 = vsub.f32 1.5, %v2049
        %v2051 = vmul.f32 %v2046, %v2050
        %vm2052 = vweird.f32 %v2035
        %vm2053 = vweird.f32 %v2046
        %vm2054 = vmor %vm2052, %vm2053
        %v2055 = vsel %vm2054, %v2046, %v2051
        %v2056 = vmul.f32 %v2032, %v2045
        %v2057 = vmul.f32 %v2033, %v2055
        %v2059 = vperm.slane %v2008, 0
        %v2061 = vmul.f32 %v2056, %v2059
        %v2062 = vmul.f32 %v2057, %v2059
        %v2064 = vperm.slane %v2009, 0
        %v2066 = vadd.f32 %v2061, %v2064
        %v2067 = vadd.f32 %v2062, %v2064
        %v2068 = vmax.f32 %v2066, 0.0
        %v2069 = vmax.f32 %v2067, 0.0
        %v2070 = vpack.c.bf16 %v2068, %v2068
        %v2071 = vpack.c.bf16 %v2069, %v2069
        %v2072 = vld [vmem:[%s722] sm:$0xf]
        %v2073 = vld [vmem:[%s722 + $0x4] sm:$0xf]
        %v2074 = vld [vmem:[%s722 + $0x8] sm:$0xf]
        %v2075 = vld [vmem:[%s722 + $0xc] sm:$0xf]
        %v2076 = vld [vmem:[%s722 + $0x10] sm:$0xf]
        %v2077 = vld [vmem:[%s722 + $0x14] sm:$0xf]
        %v2078 = vld [vmem:[%s722 + $0x18] sm:$0xf]
        %v2079 = vld [vmem:[%s722 + $0x1c] sm:$0xf]
        %v2080 = vld [vmem:[%s722 + $0x20] sm:$0xf]
        %v2081 = vld [vmem:[%s722 + $0x24] sm:$0xf]
        %v2082 = vld [vmem:[%s722 + $0x28] sm:$0xf]
        %v2083 = vld [vmem:[%s722 + $0x2c] sm:$0xf]
        %v2084 = vld [vmem:[%s722 + $0x30] sm:$0xf]
        %v2085 = vld [vmem:[%s722 + $0x34] sm:$0xf]
        %v2086 = vld [vmem:[%s722 + $0x38] sm:$0xf]
        %v2087 = vld [vmem:[%s722 + $0x3c] sm:$0xf]
        %v2096 = vunpack.c.l.b16 %v2072
        %v2097 = vunpack.c.l.b16 %v2073
        %v2098 = vunpack.c.l.b16 %v2074
        %v2099 = vunpack.c.l.b16 %v2075
        %v2100 = vunpack.c.l.b16 %v2076
        %v2101 = vunpack.c.l.b16 %v2077
        %v2102 = vunpack.c.l.b16 %v2078
        %v2103 = vunpack.c.l.b16 %v2079
        %v2104 = vpack.c.b16 %v2097, %v2096
        %v2105 = vpack.c.b16 %v2099, %v2098
        %v2106 = vpack.c.b16 %v2101, %v2100
        %v2107 = vpack.c.b16 %v2103, %v2102
        %v2113 = vsel %vm809, %v2070, 0
        %2115 = vmatpush.bf16.msra.mxu0 0
        %2116 = vmatpush.bf16.msra.mxu0 0
        %2117 = vmatpush.bf16.msra.mxu0 0
        %2118 = vmatpush.bf16.msra.mxu0 0
        %2119 = vmatpush.bf16.msra.mxu0 %v2107
        %2120 = vmatpush.bf16.msra.mxu0 %v2106
        %2121 = vmatpush.bf16.msra.mxu0 %v2105
        %2122 = vmatpush.bf16.msra.mxu0 %v2104
        %2123 = vmatmul.bf16.gmra.mxu0 %v2113
        %v2124 = vpop.f32.mrf.mxu0
        %v2125 = vadd.f32 0.0, %v2124
        %v2126 = vpop.f32.mrf.mxu0
        %2127 = vdwg.mxu0
        %v2136 = vunpack.c.l.b16 %v2080
        %v2137 = vunpack.c.l.b16 %v2081
        %v2138 = vunpack.c.l.b16 %v2082
        %v2139 = vunpack.c.l.b16 %v2083
        %v2140 = vunpack.c.l.b16 %v2084
        %v2141 = vunpack.c.l.b16 %v2085
        %v2142 = vunpack.c.l.b16 %v2086
        %v2143 = vunpack.c.l.b16 %v2087
        %v2144 = vpack.c.b16 %v2137, %v2136
        %v2145 = vpack.c.b16 %v2139, %v2138
        %v2146 = vpack.c.b16 %v2141, %v2140
        %v2147 = vpack.c.b16 %v2143, %v2142
        %v2153 = vsel %vm809, %v2071, 0
        %2155 = vmatpush.bf16.msra.mxu0 0
        %2156 = vmatpush.bf16.msra.mxu0 0
        %2157 = vmatpush.bf16.msra.mxu0 0
        %2158 = vmatpush.bf16.msra.mxu0 0
        %2159 = vmatpush.bf16.msra.mxu0 %v2147
        %2160 = vmatpush.bf16.msra.mxu0 %v2146
        %2161 = vmatpush.bf16.msra.mxu0 %v2145
        %2162 = vmatpush.bf16.msra.mxu0 %v2144
        %2163 = vmatmul.bf16.gmra.mxu0 %v2153
        %v2164 = vpop.f32.mrf.mxu0
        %v2165 = vadd.f32 0.0, %v2164
        %v2166 = vpop.f32.mrf.mxu0
        %2167 = vdwg.mxu0
        %v2168 = vld [vmem:[#allocation2] sm:$0xff]
        %vm2169 = vcmask 72704
        %v2170 = vsel %vm2169, %v2125, 0.0
        %v2171 = vsel %vm2169, %v2165, 0.0
        %v2172 = vadd.f32 %v2170, %v2171
        %v2173 = vadd.f32 %v2168, %v2172
        %2174 = vst.msk [vmem:[#allocation2] sm:$0xff] %vm2169, %v2173
        %p2175 = scmp.eq.s32.totalorder %s35, 3
        // Predicated region
        $region117: #{transformer_forward.1} parent=111 // pred_check
          %p2176 = pneg %p2175
        $region118: #{transformer_forward.1} parent=111 // pred_check_branch
          %2178 = sbr.rel (%p2176) target = $region120
        $region119: #{transformer_forward.1} parent=111 // pred_region
          %v2179 = vld [vmem:[#allocation2] sm:$0xff]
          %v2180 = vld [vmem:[%s22] sm:$0x1]
          %v2182 = vperm.slane %v2180, 0
          %v2184 = vadd.f32 %v2179, %v2182
          %v2185 = vsel %vm2169, %v2184, -inf
          %2186 = vmax.xlane.f32.xlu0 %v2185
          %v2187 = vpop.xlane.xlu0 %2186
          %v2188 = vsub.f32 %v2184, %v2187
          %v2189 = vmul.f32 %v2188, 1.442695
          %v2190 = vpow.pop %v2189
          %v2191 = vsel %vm2169, %v2190, 0.0
          %2192 = vadd.xlane.f32.xlu0 %v2191
          %v2193 = vpop.xlane.xlu0 %2192
          %v2194 = vlog2.pop %v2193
          %v2195 = vmul.f32 %v2194, 0.6931472
          %v2196 = vsub.f32 %v2188, %v2195
          %2197 = vst.msk [vmem:[#allocation3] sm:$0xff] %vm2169, %v2196
        $region120: #{transformer_forward.1} parent=111 // pred_fallthru
          _
        // Predicated region
        $region121: #{transformer_forward.1} parent=111 // pred_check
          %p2198 = pneg %p541
        $region122: #{transformer_forward.1} parent=111 // pred_check_branch
          %2200 = sbr.rel (%p2198) target = $region124
        $region123: #{transformer_forward.1} parent=111 // pred_region
          %2202 = vsyncadd [#allocation4], 0
          %s2204 = sshll.u32 [#allocation3], 4
          %s2205 = int_to_ptr.vmem [resolvable:$true] %s2204
          %s2206 = sshll.u32 %s23, 4
          %s2207 = int_to_ptr.hbm [resolvable:$true] %s2206
          %2209 = dma.vmem_to_hbm [thread:$0]  %s2205, 128, %s2207, [#allocation4]
        $region124: #{transformer_forward.1} parent=111 // pred_fallthru
          _
        // Predicated region
        $region125: #{transformer_forward.1} parent=111 // pred_check
          %p2210 = pneg %p541
        $region126: #{transformer_forward.1} parent=111 // pred_check_branch
          %2212 = sbr.rel (%p2210) target = $region128
        $region127: #{transformer_forward.1} parent=111 // pred_region
          %2214 = dma.done [#allocation4], 128
        $region128: #{transformer_forward.1} parent=111 // pred_fallthru
          _
      $region112: #{transformer_forward.1} parent=5 // pred_fallthru
        _
      %p2215 = scmp.le.s32.totalorder 2, %s30
      // Predicated region
      $region129: #{transformer_forward.1} parent=5 // pred_check
        %p2216 = pneg %p2215
      $region130: #{transformer_forward.1} parent=5 // pred_check_branch
        %2218 = sbr.rel (%p2216) target = $region132
      $region131: #{transformer_forward.1} parent=5 // pred_region
        %s2219 = ssub.s32 %s30, 2
      $region132: #{transformer_forward.1} parent=5 // pred_fallthru
        _
    $region6: #{transformer_forward.1} parent=1 // loop_footer
      %s34 = sadd.s32 1, %s30
    $region7: #{transformer_forward.1} parent=1 // loop_footer_branch
      %29 = sbr.rel target = $region3
    $region8: #{transformer_forward.1} parent=1 // loop_exit
      _
    %2220 = vsyncpa [#allocation4], 1
    %s2221 = scalar_lea.sflag [#allocation4], 1
    %2222 = vsyncpa %s2221, 1

</llo_original>
